<compile_context>
chip_gen: v6e
topology: v6e:2x2x1
jax: 0.10.0
libtpu: 0.0.40
codegen_flags: <defaults>
</compile_context>

<pallas_src>
import jax
import jax.numpy as jnp
from jax.experimental import pallas as pl
from jax.experimental.pallas import tpu as pltpu

_EPS = 1e-6
_NEG_SLOPE = 0.01


# --------------------------------------------------------------------------
# Pass 1: LayerNorm + fused GCN input projection  xw_all = h_norm @ W_stack
# --------------------------------------------------------------------------
def _prep_kernel(x_ref, gamma_ref, beta_ref, w_stack_ref, h_ref, xw_ref):
    x = x_ref[...].astype(jnp.float32)                       # [TM, H]
    mean = jnp.mean(x, axis=-1, keepdims=True)
    c = x - mean
    var = jnp.mean(c * c, axis=-1, keepdims=True)            # biased, like torch
    h = c * jax.lax.rsqrt(var + _EPS)
    h = h * gamma_ref[...] + beta_ref[...]
    h_ref[...] = h.astype(h_ref.dtype)
    xw_ref[...] = jnp.dot(h, w_stack_ref[...],
                          preferred_element_type=jnp.float32).astype(xw_ref.dtype)


# --------------------------------------------------------------------------
# Pass 2: tiled adjacency contraction + residual + FFN + residual
# --------------------------------------------------------------------------
def _gcn_ffn_kernel(flags_ref, h_ref, xw_ref,
                    adj_i_ref, adj_ii_ref, adj_iii_ref, adj_a_ref,
                    w_in_ref, b_in_ref, w_out_ref, b_out_ref,
                    out_ref, acc_ref):
    hdim = h_ref.shape[-1]
    k = pl.program_id(1)

    @pl.when(k == 0)
    def _():
        acc_ref[...] = jnp.zeros_like(acc_ref)

    xw = xw_ref[...]                                          # [TK, 4H] f32

    def _branch(b, adj_ref):
        # skip MXU work for empty adjacencies (matches `nnz() > 0` guard)
        @pl.when(flags_ref[b] != 0)
        def _():
            acc_ref[...] += jnp.dot(
                adj_ref[...].astype(jnp.float32),             # bf16 -> f32 (exact)
                xw[:, b * hdim:(b + 1) * hdim],
                preferred_element_type=jnp.float32)

    _branch(0, adj_i_ref)
    _branch(1, adj_ii_ref)
    _branch(2, adj_iii_ref)
    _branch(3, adj_a_ref)

    @pl.when(k == pl.num_programs(1) - 1)
    def _():
        h2 = h_ref[...].astype(jnp.float32) + acc_ref[...]    # residual after GCN
        inter = jnp.dot(h2, w_in_ref[...],
                        preferred_element_type=jnp.float32) + b_in_ref[...]
        inter = jnp.where(inter >= 0.0, inter, _NEG_SLOPE * inter)   # LeakyReLU
        ff = jnp.dot(inter, w_out_ref[...],
                     preferred_element_type=jnp.float32) + b_out_ref[...]
        out_ref[...] = (h2 + ff).astype(out_ref.dtype)        # residual after FFN


def _pick_tile(n, target=256):
    """Largest sublane-aligned tile <= target that divides n (or full n)."""
    if n <= target:
        return n
    start = (target // 8) * 8
    for t in range(start, 7, -8):
        if n % t == 0:
            return t
    return n


def encoder_layer(x, gamma, beta, adj_i, adj_ii, adj_iii, adj_a,
                  w_i, w_ii, w_iii, w_a, w_in, b_in, w_out, b_out):
    """x: [N, H] f32. adj_*: dense [N, N] with {0,1} values.
    Linear weights pre-transposed to [in, out]."""
    N, H = x.shape
    I = w_in.shape[1]
    tm = _pick_tile(N)
    tk = _pick_tile(N)

    gamma2 = gamma.reshape(1, H).astype(jnp.float32)
    beta2 = beta.reshape(1, H).astype(jnp.float32)
    b_in2 = b_in.reshape(1, I).astype(jnp.float32)
    b_out2 = b_out.reshape(1, H).astype(jnp.float32)
    w_stack = jnp.concatenate([w_i, w_ii, w_iii, w_a], axis=1).astype(jnp.float32)

    # {0,1} adjacency -> bf16 transport is lossless and halves HBM bytes.
    adj_i16 = adj_i.astype(jnp.bfloat16)
    adj_ii16 = adj_ii.astype(jnp.bfloat16)
    adj_iii16 = adj_iii.astype(jnp.bfloat16)
    adj_a16 = adj_a.astype(jnp.bfloat16)

    flags = jnp.stack([
        jnp.count_nonzero(adj_i) > 0,
        jnp.count_nonzero(adj_ii) > 0,
        jnp.count_nonzero(adj_iii) > 0,
        jnp.count_nonzero(adj_a) > 0,
    ]).astype(jnp.int32)

    # ---------------- pass 1: LayerNorm + fused h @ W_stack ----------------
    h_norm, xw_all = pl.pallas_call(
        _prep_kernel,
        out_shape=(jax.ShapeDtypeStruct((N, H), jnp.float32),
                   jax.ShapeDtypeStruct((N, 4 * H), jnp.float32)),
        grid_spec=pltpu.PrefetchScalarGridSpec(
            num_scalar_prefetch=0,
            grid=(N // tm,),
            in_specs=[
                pl.BlockSpec((tm, H), lambda i: (i, 0)),          # x row tile
                pl.BlockSpec((1, H), lambda i: (0, 0)),           # gamma
                pl.BlockSpec((1, H), lambda i: (0, 0)),           # beta
                pl.BlockSpec((H, 4 * H), lambda i: (0, 0)),       # W_stack (resident)
            ],
            out_specs=[
                pl.BlockSpec((tm, H), lambda i: (i, 0)),          # h_norm
                pl.BlockSpec((tm, 4 * H), lambda i: (i, 0)),      # xw_all
            ]),
        compiler_params=pltpu.CompilerParams(
            dimension_semantics=("parallel",),
            vmem_limit_bytes=32 * 1024 * 1024),
    )(x, gamma2, beta2, w_stack)

    # -------- pass 2: tiled adj contraction + residual + FFN + residual -----
    out = pl.pallas_call(
        _gcn_ffn_kernel,
        out_shape=jax.ShapeDtypeStruct((N, H), x.dtype),
        grid_spec=pltpu.PrefetchScalarGridSpec(
            num_scalar_prefetch=1,                                # nnz flags
            grid=(N // tm, N // tk),                              # (rows, K) — K last
            in_specs=[
                pl.BlockSpec((tm, H), lambda i, k, f: (i, 0)),        # h_norm row tile
                pl.BlockSpec((tk, 4 * H), lambda i, k, f: (k, 0)),    # xw_all K tile
                pl.BlockSpec((tm, tk), lambda i, k, f: (i, k)),       # adj_i
                pl.BlockSpec((tm, tk), lambda i, k, f: (i, k)),       # adj_ii
                pl.BlockSpec((tm, tk), lambda i, k, f: (i, k)),       # adj_iii
                pl.BlockSpec((tm, tk), lambda i, k, f: (i, k)),       # adj_a
                pl.BlockSpec((H, I), lambda i, k, f: (0, 0)),         # w_in (resident)
                pl.BlockSpec((1, I), lambda i, k, f: (0, 0)),         # b_in
                pl.BlockSpec((I, H), lambda i, k, f: (0, 0)),         # w_out (resident)
                pl.BlockSpec((1, H), lambda i, k, f: (0, 0)),         # b_out
            ],
            out_specs=pl.BlockSpec((tm, H), lambda i, k, f: (i, 0)),
            scratch_shapes=[pltpu.VMEM((tm, H), jnp.float32)]),       # accumulator
        compiler_params=pltpu.CompilerParams(
            dimension_semantics=("parallel", "arbitrary"),
            vmem_limit_bytes=32 * 1024 * 1024),
    )(flags, h_norm, xw_all,
      adj_i16, adj_ii16, adj_iii16, adj_a16,
      w_in, b_in2, w_out, b_out2)

    return out


# --------------------------------------------------------------------------
# Pure-JAX reference
# --------------------------------------------------------------------------
def _reference(x, gamma, beta, adjs, gcn_ws, w_in, b_in, w_out, b_out, eps=1e-6):
    mean = jnp.mean(x, axis=-1, keepdims=True)
    var = jnp.mean((x - mean) ** 2, axis=-1, keepdims=True)
    h = (x - mean) / jnp.sqrt(var + eps) * gamma + beta
    gcn = 0.0
    for adj, w in zip(adjs, gcn_ws):
        gcn = gcn + adj @ (h @ w)
    h2 = h + gcn
    inter = h2 @ w_in + b_in
    inter = jnp.where(inter >= 0, inter, 0.01 * inter)
    return h2 + inter @ w_out + b_out


if __name__ == "__main__":
    key = jax.random.PRNGKey(0)
    # lane-dense hidden (H multiple of 128) and N large enough to tile (grid 2x2)
    N, H, I = 512, 128, 256

    keys = jax.random.split(key, 14)
    x = jax.random.normal(keys[0], (N, H), dtype=jnp.float32)

    # dense 0/1 adjacencies; adj_iii is all-zero to exercise the nnz==0 skip path
    adj_i = (jax.random.uniform(keys[1], (N, N)) > 0.90).astype(jnp.float32)
    adj_ii = (jax.random.uniform(keys[2], (N, N)) > 0.95).astype(jnp.float32)
    adj_iii = jnp.zeros((N, N), dtype=jnp.float32)
    adj_a = (jax.random.uniform(keys[3], (N, N)) > 0.97).astype(jnp.float32)

    # parameters (PyTorch shapes transposed to [in, out])
    scale = 0.05
    w_i = scale * jax.random.normal(keys[4], (H, H), dtype=jnp.float32)
    w_ii = scale * jax.random.normal(keys[5], (H, H), dtype=jnp.float32)
    w_iii = scale * jax.random.normal(keys[6], (H, H), dtype=jnp.float32)
    w_a = scale * jax.random.normal(keys[7], (H, H), dtype=jnp.float32)
    w_in = scale * jax.random.normal(keys[8], (H, I), dtype=jnp.float32)
    b_in = scale * jax.random.normal(keys[9], (I,), dtype=jnp.float32)
    w_out = scale * jax.random.normal(keys[10], (I, H), dtype=jnp.float32)
    b_out = scale * jax.random.normal(keys[11], (H,), dtype=jnp.float32)
    gamma = 1.0 + 0.1 * jax.random.normal(keys[12], (H,), dtype=jnp.float32)
    beta = 0.1 * jax.random.normal(keys[13], (H,), dtype=jnp.float32)

    out = encoder_layer(x, gamma, beta, adj_i, adj_ii, adj_iii, adj_a,
                        w_i, w_ii, w_iii, w_a, w_in, b_in, w_out, b_out)
    out = jax.block_until_ready(out)

    ref = _reference(x, gamma, beta,
                     [adj_i, adj_ii, adj_iii, adj_a],
                     [w_i, w_ii, w_iii, w_a],
                     w_in, b_in, w_out, b_out)

    assert out.shape == (N, H)
    # tolerance accounts only for tiled f32 accumulation-order differences
    assert jnp.allclose(out, ref, atol=2e-3, rtol=2e-3), "mismatch vs reference"

    print("KERNEL_OK")
</pallas_src>

<mosaic_0001>
module attributes {stable_mosaic.version = 11 : i64} {
  func.func @_prep_kernel(%arg0: i32, %arg1: memref<256x128xf32, #tpu.memory_space<vmem>>, %arg2: memref<1x128xf32, #tpu.memory_space<vmem>>, %arg3: memref<1x128xf32, #tpu.memory_space<vmem>>, %arg4: memref<128x512xf32, #tpu.memory_space<vmem>>, %arg5: memref<256x128xf32, #tpu.memory_space<vmem>>, %arg6: memref<256x512xf32, #tpu.memory_space<vmem>>) attributes {dimension_semantics = [#tpu.dimension_semantics<parallel>], iteration_bounds = array<i64: 2>, scalar_prefetch = 0 : i64, scratch_operands = 0 : i64, tpu.core_type = #tpu.core_type<tc>, window_params = [{transform_indices = @transform_0, window_bounds = array<i64: 256, 128>}, {pipeline_mode = #tpu.pipeline_mode<synchronous>, transform_indices = @transform_1, window_bounds = array<i64: 1, 128>}, {pipeline_mode = #tpu.pipeline_mode<synchronous>, transform_indices = @transform_2, window_bounds = array<i64: 1, 128>}, {pipeline_mode = #tpu.pipeline_mode<synchronous>, transform_indices = @transform_3, window_bounds = array<i64: 128, 512>}, {transform_indices = @transform_4, window_bounds = array<i64: 256, 128>}, {transform_indices = @transform_5, window_bounds = array<i64: 256, 512>}]} {
    %c0 = arith.constant 0 : index
    %c0_0 = arith.constant 0 : index
    %0 = vector.load %arg1[%c0, %c0_0] : memref<256x128xf32, #tpu.memory_space<vmem>>, vector<256x128xf32>
    %cst = arith.constant dense<0.000000e+00> : vector<256xf32>
    %1 = vector.multi_reduction <add>, %0, %cst [1] : vector<256x128xf32> to vector<256xf32>
    %2 = vector.shape_cast %1 : vector<256xf32> to vector<256x1xf32>
    %cst_1 = arith.constant 1.280000e+02 : f32
    %3 = vector.broadcast %cst_1 : f32 to vector<256x1xf32>
    %4 = arith.divf %2, %3 : vector<256x1xf32>
    %5 = vector.broadcast %4 : vector<256x1xf32> to vector<256x128xf32>
    %6 = arith.subf %0, %5 : vector<256x128xf32>
    %7 = arith.mulf %6, %6 : vector<256x128xf32>
    %cst_2 = arith.constant dense<0.000000e+00> : vector<256xf32>
    %8 = vector.multi_reduction <add>, %7, %cst_2 [1] : vector<256x128xf32> to vector<256xf32>
    %9 = vector.shape_cast %8 : vector<256xf32> to vector<256x1xf32>
    %cst_3 = arith.constant 1.280000e+02 : f32
    %10 = vector.broadcast %cst_3 : f32 to vector<256x1xf32>
    %11 = arith.divf %9, %10 : vector<256x1xf32>
    %cst_4 = arith.constant 9.99999997E-7 : f32
    %12 = vector.broadcast %cst_4 : f32 to vector<256x1xf32>
    %13 = arith.addf %11, %12 : vector<256x1xf32>
    %14 = math.rsqrt %13 : vector<256x1xf32>
    %15 = vector.broadcast %14 : vector<256x1xf32> to vector<256x128xf32>
    %16 = arith.mulf %6, %15 : vector<256x128xf32>
    %c0_5 = arith.constant 0 : index
    %c0_6 = arith.constant 0 : index
    %17 = vector.load %arg2[%c0_5, %c0_6] : memref<1x128xf32, #tpu.memory_space<vmem>>, vector<1x128xf32>
    %18 = vector.broadcast %17 : vector<1x128xf32> to vector<256x128xf32>
    %19 = arith.mulf %16, %18 : vector<256x128xf32>
    %c0_7 = arith.constant 0 : index
    %c0_8 = arith.constant 0 : index
    %20 = vector.load %arg3[%c0_7, %c0_8] : memref<1x128xf32, #tpu.memory_space<vmem>>, vector<1x128xf32>
    %21 = vector.broadcast %20 : vector<1x128xf32> to vector<256x128xf32>
    %22 = arith.addf %19, %21 : vector<256x128xf32>
    %c0_9 = arith.constant 0 : index
    %c0_10 = arith.constant 0 : index
    %23 = vector.load %arg5[%c0_9, %c0_10] : memref<256x128xf32, #tpu.memory_space<vmem>>, vector<256x128xf32>
    tpu.vector_store %arg5[%c0_9, %c0_10], %22 {strides = array<i32>} : memref<256x128xf32, #tpu.memory_space<vmem>>, vector<256x128xf32>,
    %c0_11 = arith.constant 0 : index
    %c0_12 = arith.constant 0 : index
    %24 = vector.load %arg4[%c0_11, %c0_12] : memref<128x512xf32, #tpu.memory_space<vmem>>, vector<128x512xf32>
    %cst_13 = arith.constant dense<0.000000e+00> : vector<256x512xf32>
    %25 = tpu.matmul %22, %24, %cst_13 {dimension_numbers = #tpu.dot_dimension_numbers<[1], [0], [0], [1], [0, 0, 1, 1], [], []>} : vector<256x128xf32>, vector<128x512xf32>, vector<256x512xf32> -> vector<256x512xf32>
    %c0_14 = arith.constant 0 : index
    %c0_15 = arith.constant 0 : index
    %26 = vector.load %arg6[%c0_14, %c0_15] : memref<256x512xf32, #tpu.memory_space<vmem>>, vector<256x512xf32>
    tpu.vector_store %arg6[%c0_14, %c0_15], %25 {strides = array<i32>} : memref<256x512xf32, #tpu.memory_space<vmem>>, vector<256x512xf32>,
    return
  }
  func.func @transform_0(%arg0: i32) -> (i32, i32) {
    %c0_i32 = arith.constant 0 : i32
    %c0_i32_0 = arith.constant 0 : i32
    return %arg0, %c0_i32 : i32, i32
  }
  func.func @transform_1(%arg0: i32) -> (i32, i32) {
    %c0_i32 = arith.constant 0 : i32
    %c0_i32_0 = arith.constant 0 : i32
    %c0_i32_1 = arith.constant 0 : i32
    return %c0_i32, %c0_i32_0 : i32, i32
  }
  func.func @transform_2(%arg0: i32) -> (i32, i32) {
    %c0_i32 = arith.constant 0 : i32
    %c0_i32_0 = arith.constant 0 : i32
    %c0_i32_1 = arith.constant 0 : i32
    return %c0_i32, %c0_i32_0 : i32, i32
  }
  func.func @transform_3(%arg0: i32) -> (i32, i32) {
    %c0_i32 = arith.constant 0 : i32
    %c0_i32_0 = arith.constant 0 : i32
    %c0_i32_1 = arith.constant 0 : i32
    return %c0_i32, %c0_i32_0 : i32, i32
  }
  func.func @transform_4(%arg0: i32) -> (i32, i32) {
    %c0_i32 = arith.constant 0 : i32
    %c0_i32_0 = arith.constant 0 : i32
    return %arg0, %c0_i32 : i32, i32
  }
  func.func @transform_5(%arg0: i32) -> (i32, i32) {
    %c0_i32 = arith.constant 0 : i32
    %c0_i32_0 = arith.constant 0 : i32
    return %arg0, %c0_i32 : i32, i32
  }
}

</mosaic_0001>

<llo_original>
// kernel: tpu_custom_call.1
$region0: #{tpu_custom_call.1}
  #allocation0 [shape = 'u32[]', space=smem, size = 0x4, offset = 0x4, fixed_abs, tag = 'smem constant byte address 0x4 - core index']
  #allocation1 [shape = 'u32[144,128]{1,0:T(1,128)}', space=vmem, size = 0x12000, scoped, tag = 'internal scratch']
  %s0 = inlined_call_operand.hbm [shape: f32[512,128], index: 0, kind: input, shape index: {}]
  %s1 = inlined_call_operand.vmem [shape: f32[1,128], index: 1, kind: input, shape index: {}]
  %s2 = inlined_call_operand.vmem [shape: f32[1,128], index: 2, kind: input, shape index: {}]
  %s3 = inlined_call_operand.hbm [shape: f32[128,512], index: 3, kind: input, shape index: {}]
  %s4 = inlined_call_operand.hbm [shape: f32[512,128], index: 4, kind: output, shape index: {0}]
  %s5 = inlined_call_operand.hbm [shape: f32[512,512], index: 5, kind: output, shape index: {1}]
  %6 = xla_tuple %s4, %s5
  %s7 = sld [smem:[#allocation0]]
  $region65: #{tpu_custom_call.1} parent=0
    _
  %s9 = ssub.s32 1, %s7
  %s10 = scalar_select 0, %s9, %s7
  $region1: #{tpu_custom_call.1} parent=0
    #allocation2 [shape = 'u8[262144]{0}', space=vmem, size = 0x40000, scoped, tag = 'input window, operand 0']
    #allocation3 [shape = 's32[2]{0}', space=sflag, size = 0x8, scoped, tag = 'scoped memory for tpu_custom_call.1']
    #allocation4 [shape = 's32[2]{0}', space=sflag, size = 0x8, scoped, tag = 'scoped memory for tpu_custom_call.1']
    #allocation5 [shape = 'u8[262144]{0}', space=vmem, size = 0x40000, scoped, tag = 'input window, operand 3, single buffered']
    #allocation6 [shape = 's32[1]{0}', space=sflag, size = 0x4, scoped, tag = 'scoped memory for tpu_custom_call.1']
    #allocation7 [shape = 'u8[262144]{0}', space=vmem, size = 0x40000, scoped, tag = 'output window, operand 0']
    #allocation8 [shape = 'u8[1048576]{0}', space=vmem, size = 0x100000, scoped, tag = 'output window, operand 1']
    #allocation9 [shape = 's32[2]{0}', space=sflag, size = 0x8, scoped, tag = 'scoped memory for tpu_custom_call.1']
    %11 = vsyncpa [#allocation3], 0
    %s12 = scalar_lea.sflag [#allocation3], 1
    %13 = vsyncpa %s12, 0
    %14 = vsyncpa [#allocation6], 0
    %15 = vsyncpa [#allocation4], 0
    %s16 = scalar_lea.sflag [#allocation4], 1
    %17 = vsyncpa %s16, 0
    %18 = vsyncpa [#allocation9], 0
    %s19 = scalar_lea.sflag [#allocation9], 1
    %20 = vsyncpa %s19, 0
    loop: start=0, step=1, limit=4
    $region2: #{tpu_custom_call.1} parent=1 // loop_pre_header
      _
    $region3: #{tpu_custom_call.1} parent=1 // loop_header
      %s22 = sphi 0, %s26
      %p23 = scmp.ge.s32.totalorder %s22, 4
      %s32 = sphi 0, %s34
      %s35 = sphi 0, %s32
      %s36 = sphi 0, %s35
      %s52 = sphi 0, %s36
      %s56 = sphi 0, %s56
      %s58 = sphi 0, %s56
      %s59 = sphi 0, %s58
      %s73 = sphi 0, %s59
      %s77 = sphi 0, %s77
      %s79 = sphi 0, %s77
      %s80 = sphi 0, %s79
      %s94 = sphi 0, %s80
      %s98 = sphi 0, %s98
      %s100 = sphi 0, %s98
      %s101 = sphi 0, %s100
      %s115 = sphi 0, %s101
      %s121 = sphi 0, %s123
      %s124 = sphi 0, %s121
      %s125 = sphi 0, %s124
      %s141 = sphi 0, %s125
      %s147 = sphi 0, %s149
      %s150 = sphi 0, %s147
      %s151 = sphi 0, %s150
      %s167 = sphi 0, %s151
    $region4: #{tpu_custom_call.1} parent=1 // loop_header_branch
      %25 = sbr.rel (%p23) target = $region8
    $region5: #{tpu_custom_call.1} parent=1 // loop_body
      %s27 = ssub.s32 %s22, 1
      %s28 = ssub.s32 %s22, 2
      %s29 = sadd.s32 %s22, 1
      %s30 = ssub.s32 %s22, %s29
      %p31 = scmp.eq.s32.totalorder %s30, 0
      %s33 = sadd.s32 %s32, 1
      %s34 = scalar_select %p31, %s32, %s33
      %p37 = pneg %p31
      %p38 = scmp.eq.s32.totalorder %s22, 1
      %p39 = por %p37, %p38
      %p40 = scmp.ne.s32.totalorder %s32, %s35
      %p41 = scmp.eq.s32.totalorder %s22, 0
      %p42 = por %p40, %p41
      %p43 = scmp.ne.s32.totalorder %s32, %s35
      %p44 = scmp.eq.s32.totalorder %s27, 1
      %p45 = por %p43, %p44
      %p46 = scmp.ne.s32.totalorder %s35, %s36
      %p47 = scmp.eq.s32.totalorder %s27, 0
      %p48 = por %p46, %p47
      %p49 = scmp.ne.s32.totalorder %s35, %s36
      %p50 = scmp.eq.s32.totalorder %s28, 1
      %p51 = por %p49, %p50
      %p53 = scmp.ne.s32.totalorder %s36, %s52
      %p54 = scmp.eq.s32.totalorder %s28, 0
      %p55 = por %p53, %p54
      %s57 = sadd.s32 %s56, 1
      %p60 = scmp.eq.s32.totalorder %s22, 1
      %p61 = scmp.ne.s32.totalorder %s56, %s58
      %p62 = scmp.eq.s32.totalorder %s22, 0
      %p63 = por %p61, %p62
      %p64 = scmp.ne.s32.totalorder %s56, %s58
      %p65 = scmp.eq.s32.totalorder %s27, 1
      %p66 = por %p64, %p65
      %p67 = scmp.ne.s32.totalorder %s58, %s59
      %p68 = scmp.eq.s32.totalorder %s27, 0
      %p69 = por %p67, %p68
      %p70 = scmp.ne.s32.totalorder %s58, %s59
      %p71 = scmp.eq.s32.totalorder %s28, 1
      %p72 = por %p70, %p71
      %p74 = scmp.ne.s32.totalorder %s59, %s73
      %p75 = scmp.eq.s32.totalorder %s28, 0
      %p76 = por %p74, %p75
      %s78 = sadd.s32 %s77, 1
      %p81 = scmp.eq.s32.totalorder %s22, 1
      %p82 = scmp.ne.s32.totalorder %s77, %s79
      %p83 = scmp.eq.s32.totalorder %s22, 0
      %p84 = por %p82, %p83
      %p85 = scmp.ne.s32.totalorder %s77, %s79
      %p86 = scmp.eq.s32.totalorder %s27, 1
      %p87 = por %p85, %p86
      %p88 = scmp.ne.s32.totalorder %s79, %s80
      %p89 = scmp.eq.s32.totalorder %s27, 0
      %p90 = por %p88, %p89
      %p91 = scmp.ne.s32.totalorder %s79, %s80
      %p92 = scmp.eq.s32.totalorder %s28, 1
      %p93 = por %p91, %p92
      %p95 = scmp.ne.s32.totalorder %s80, %s94
      %p96 = scmp.eq.s32.totalorder %s28, 0
      %p97 = por %p95, %p96
      %s99 = sadd.s32 %s98, 1
      %p102 = scmp.eq.s32.totalorder %s22, 1
      %p103 = scmp.ne.s32.totalorder %s98, %s100
      %p104 = scmp.eq.s32.totalorder %s22, 0
      %p105 = por %p103, %p104
      %p106 = scmp.ne.s32.totalorder %s98, %s100
      %p107 = scmp.eq.s32.totalorder %s27, 1
      %p108 = por %p106, %p107
      %p109 = scmp.ne.s32.totalorder %s100, %s101
      %p110 = scmp.eq.s32.totalorder %s27, 0
      %p111 = por %p109, %p110
      %p112 = scmp.ne.s32.totalorder %s100, %s101
      %p113 = scmp.eq.s32.totalorder %s28, 1
      %p114 = por %p112, %p113
      %p116 = scmp.ne.s32.totalorder %s101, %s115
      %p117 = scmp.eq.s32.totalorder %s28, 0
      %p118 = por %p116, %p117
      %s119 = ssub.s32 %s22, %s29
      %p120 = scmp.eq.s32.totalorder %s119, 0
      %s122 = sadd.s32 %s121, 1
      %s123 = scalar_select %p120, %s121, %s122
      %p126 = pneg %p120
      %p127 = scmp.eq.s32.totalorder %s22, 1
      %p128 = por %p126, %p127
      %p129 = scmp.ne.s32.totalorder %s121, %s124
      %p130 = scmp.eq.s32.totalorder %s22, 0
      %p131 = por %p129, %p130
      %p132 = scmp.ne.s32.totalorder %s121, %s124
      %p133 = scmp.eq.s32.totalorder %s27, 1
      %p134 = por %p132, %p133
      %p135 = scmp.ne.s32.totalorder %s124, %s125
      %p136 = scmp.eq.s32.totalorder %s27, 0
      %p137 = por %p135, %p136
      %p138 = scmp.ne.s32.totalorder %s124, %s125
      %p139 = scmp.eq.s32.totalorder %s28, 1
      %p140 = por %p138, %p139
      %p142 = scmp.ne.s32.totalorder %s125, %s141
      %p143 = scmp.eq.s32.totalorder %s28, 0
      %p144 = por %p142, %p143
      %s145 = ssub.s32 %s22, %s29
      %p146 = scmp.eq.s32.totalorder %s145, 0
      %s148 = sadd.s32 %s147, 1
      %s149 = scalar_select %p146, %s147, %s148
      %p152 = pneg %p146
      %p153 = scmp.eq.s32.totalorder %s22, 1
      %p154 = por %p152, %p153
      %p155 = scmp.ne.s32.totalorder %s147, %s150
      %p156 = scmp.eq.s32.totalorder %s22, 0
      %p157 = por %p155, %p156
      %p158 = scmp.ne.s32.totalorder %s147, %s150
      %p159 = scmp.eq.s32.totalorder %s27, 1
      %p160 = por %p158, %p159
      %p161 = scmp.ne.s32.totalorder %s150, %s151
      %p162 = scmp.eq.s32.totalorder %s27, 0
      %p163 = por %p161, %p162
      %p164 = scmp.ne.s32.totalorder %s150, %s151
      %p165 = scmp.eq.s32.totalorder %s28, 1
      %p166 = por %p164, %p165
      %p168 = scmp.ne.s32.totalorder %s151, %s167
      %p169 = scmp.eq.s32.totalorder %s28, 0
      %p170 = por %p168, %p169
      %p171 = scmp.le.s32.totalorder 1, %s22
      %p172 = scmp.lt.s32.totalorder %s22, 3
      %p173 = pnand %p171, %p172
      %p174 = pneg %p173
      // Predicated region
      $region9: #{tpu_custom_call.1} parent=5 // pred_check
        _
      $region10: #{tpu_custom_call.1} parent=5 // pred_check_branch
        %176 = sbr.rel (%p173) target = $region12
      $region11: #{tpu_custom_call.1} parent=5 // pred_region
        %s177 = ssub.s32 %s22, 1
        // Predicated region
        $region13: #{tpu_custom_call.1} parent=11 // pred_check
          %p178 = pneg %p69
        $region14: #{tpu_custom_call.1} parent=11 // pred_check_branch
          %180 = sbr.rel (%p178) target = $region16
        $region15: #{tpu_custom_call.1} parent=11 // pred_region
          _
        $region16: #{tpu_custom_call.1} parent=11 // pred_fallthru
          _
        // Predicated region
        $region17: #{tpu_custom_call.1} parent=11 // pred_check
          %p181 = pneg %p90
        $region18: #{tpu_custom_call.1} parent=11 // pred_check_branch
          %183 = sbr.rel (%p181) target = $region20
        $region19: #{tpu_custom_call.1} parent=11 // pred_region
          _
        $region20: #{tpu_custom_call.1} parent=11 // pred_fallthru
          _
        // Predicated region
        $region21: #{tpu_custom_call.1} parent=11 // pred_check
          %p184 = pneg %p111
        $region22: #{tpu_custom_call.1} parent=11 // pred_check_branch
          %186 = sbr.rel (%p184) target = $region24
        $region23: #{tpu_custom_call.1} parent=11 // pred_region
          %s188 = ssub.s32 8192, 8192
          %189 = vsyncadd [#allocation6], %s188
          %s190 = sshll.u32 [#allocation5], 4
          %s191 = int_to_ptr.vmem [resolvable:$true] %s190
          %196 = dma.hbm_to_vmem [thread:$0]  %s3, 8192, %s191, [#allocation6], 512, 512, 32
        $region24: #{tpu_custom_call.1} parent=11 // pred_fallthru
          _
      $region12: #{tpu_custom_call.1} parent=5 // pred_fallthru
        _
      %p197 = scmp.lt.s32.totalorder %s22, 2
      // Predicated region
      $region25: #{tpu_custom_call.1} parent=5 // pred_check
        %p198 = pneg %p197
      $region26: #{tpu_custom_call.1} parent=5 // pred_check_branch
        %200 = sbr.rel (%p198) target = $region28
      $region27: #{tpu_custom_call.1} parent=5 // pred_region
        // Predicated region
        $region29: #{tpu_custom_call.1} parent=27 // pred_check
          %p201 = pneg %p42
        $region30: #{tpu_custom_call.1} parent=27 // pred_check_branch
          %203 = sbr.rel (%p201) target = $region32
        $region31: #{tpu_custom_call.1} parent=27 // pred_region
          %s204 = sand.u32 %s32, 1
          %s205 = scalar_lea.sflag [#allocation3], %s204
          %s206 = sand.u32 %s32, 1
          %s207 = smul.addr %s206, 256
          %s208 = scalar_lea.vmem [#allocation2], %s207
          %s209 = smul.u32 32, %s22
          %s211 = ssub.s32 4096, 4096
          %212 = vsyncadd %s205, %s211
          %s213 = smul.addr %s209, 128
          %s214 = scalar_lea.hbm %s0, %s213
          %s215 = sshll.u32 %s208, 4
          %s216 = int_to_ptr.vmem [resolvable:$true] %s215
          %221 = dma.hbm_to_vmem [thread:$0]  %s214, 4096, %s216, %s205, 128, 128, 8
        $region32: #{tpu_custom_call.1} parent=27 // pred_fallthru
          _
      $region28: #{tpu_custom_call.1} parent=5 // pred_fallthru
        _
      %p222 = scmp.le.s32.totalorder 1, %s22
      %p223 = scmp.lt.s32.totalorder %s22, 3
      %p224 = pnand %p222, %p223
      %p225 = pneg %p224
      // Predicated region
      $region33: #{tpu_custom_call.1} parent=5 // pred_check
        _
      $region34: #{tpu_custom_call.1} parent=5 // pred_check_branch
        %227 = sbr.rel (%p224) target = $region36
      $region35: #{tpu_custom_call.1} parent=5 // pred_region
        %s228 = ssub.s32 %s22, 1
        %s229 = sand.u32 %s35, 1
        %s230 = scalar_lea.sflag [#allocation3], %s229
        %s231 = sand.u32 %s35, 1
        %s232 = smul.addr %s231, 256
        %s233 = scalar_lea.vmem [#allocation2], %s232
        // Predicated region
        $region37: #{tpu_custom_call.1} parent=35 // pred_check
          %p234 = pneg %p48
        $region38: #{tpu_custom_call.1} parent=35 // pred_check_branch
          %236 = sbr.rel (%p234) target = $region40
        $region39: #{tpu_custom_call.1} parent=35 // pred_region
          %237 = dma.done %s230, 4096
        $region40: #{tpu_custom_call.1} parent=35 // pred_fallthru
          _
        // Predicated region
        $region41: #{tpu_custom_call.1} parent=35 // pred_check
          %p238 = pneg %p111
        $region42: #{tpu_custom_call.1} parent=35 // pred_check_branch
          %240 = sbr.rel (%p238) target = $region44
        $region43: #{tpu_custom_call.1} parent=35 // pred_region
          %241 = dma.done [#allocation6], 8192
        $region44: #{tpu_custom_call.1} parent=35 // pred_fallthru
          _
        %s242 = sand.u32 %s35, 1
        %s243 = scalar_lea.sflag [#allocation3], %s242
        %s244 = sand.u32 %s35, 1
        %s245 = smul.addr %s244, 256
        %s246 = scalar_lea.vmem [#allocation2], %s245
        %p247 = pneg %p48
        %p248 = pneg %p45
        %p249 = pneg %p69
        %p250 = pneg %p66
        %p251 = pneg %p90
        %p252 = pneg %p87
        %p253 = pneg %p111
        %p254 = pneg %p108
        %p255 = pneg %p137
        %p256 = pneg %p134
        %s257 = sand.u32 %s124, 1
        %s258 = scalar_lea.sflag [#allocation4], %s257
        %s259 = sand.u32 %s124, 1
        %s260 = smul.addr %s259, 256
        %s261 = scalar_lea.vmem [#allocation7], %s260
        %p262 = pneg %p163
        %p263 = pneg %p160
        %s264 = sand.u32 %s150, 1
        %s265 = scalar_lea.sflag [#allocation9], %s264
        %s266 = sand.u32 %s150, 1
        %s267 = smul.addr %s266, 1024
        %s268 = scalar_lea.vmem [#allocation8], %s267
        %s269 = smul.u32 32, %s27
        %s270 = smul.u32 32, %s27
        %s271 = smul.u32 32, %s27
        %v272 = vld [vmem:[%s233] sm:$0xff]
        %v273 = vld [vmem:[%s233 + $0x8] sm:$0xff]
        %v274 = vld [vmem:[%s233 + $0x10] sm:$0xff]
        %v275 = vld [vmem:[%s233 + $0x18] sm:$0xff]
        %v276 = vld [vmem:[%s233 + $0x20] sm:$0xff]
        %v277 = vld [vmem:[%s233 + $0x28] sm:$0xff]
        %v278 = vld [vmem:[%s233 + $0x30] sm:$0xff]
        %v279 = vld [vmem:[%s233 + $0x38] sm:$0xff]
        %v280 = vld [vmem:[%s233 + $0x40] sm:$0xff]
        %v281 = vld [vmem:[%s233 + $0x48] sm:$0xff]
        %v282 = vld [vmem:[%s233 + $0x50] sm:$0xff]
        %v283 = vld [vmem:[%s233 + $0x58] sm:$0xff]
        %v284 = vld [vmem:[%s233 + $0x60] sm:$0xff]
        %v285 = vld [vmem:[%s233 + $0x68] sm:$0xff]
        %v286 = vld [vmem:[%s233 + $0x70] sm:$0xff]
        %v287 = vld [vmem:[%s233 + $0x78] sm:$0xff]
        %v288 = vld [vmem:[%s233 + $0x80] sm:$0xff]
        %v289 = vld [vmem:[%s233 + $0x88] sm:$0xff]
        %v290 = vld [vmem:[%s233 + $0x90] sm:$0xff]
        %v291 = vld [vmem:[%s233 + $0x98] sm:$0xff]
        %v292 = vld [vmem:[%s233 + $0xa0] sm:$0xff]
        %v293 = vld [vmem:[%s233 + $0xa8] sm:$0xff]
        %v294 = vld [vmem:[%s233 + $0xb0] sm:$0xff]
        %v295 = vld [vmem:[%s233 + $0xb8] sm:$0xff]
        %v296 = vld [vmem:[%s233 + $0xc0] sm:$0xff]
        %v297 = vld [vmem:[%s233 + $0xc8] sm:$0xff]
        %v298 = vld [vmem:[%s233 + $0xd0] sm:$0xff]
        %v299 = vld [vmem:[%s233 + $0xd8] sm:$0xff]
        %v300 = vld [vmem:[%s233 + $0xe0] sm:$0xff]
        %v301 = vld [vmem:[%s233 + $0xe8] sm:$0xff]
        %v302 = vld [vmem:[%s233 + $0xf0] sm:$0xff]
        %v303 = vld [vmem:[%s233 + $0xf8] sm:$0xff]
        %304 = vadd.xlane.f32.xlu0 %v272
        %v305 = vpop.xlane.xlu0 %304
        %306 = vadd.xlane.f32.xlu0 %v273
        %v307 = vpop.xlane.xlu0 %306
        %308 = vadd.xlane.f32.xlu0 %v274
        %v309 = vpop.xlane.xlu0 %308
        %310 = vadd.xlane.f32.xlu0 %v275
        %v311 = vpop.xlane.xlu0 %310
        %312 = vadd.xlane.f32.xlu0 %v276
        %v313 = vpop.xlane.xlu0 %312
        %314 = vadd.xlane.f32.xlu0 %v277
        %v315 = vpop.xlane.xlu0 %314
        %316 = vadd.xlane.f32.xlu0 %v278
        %v317 = vpop.xlane.xlu0 %316
        %318 = vadd.xlane.f32.xlu0 %v279
        %v319 = vpop.xlane.xlu0 %318
        %320 = vadd.xlane.f32.xlu0 %v280
        %v321 = vpop.xlane.xlu0 %320
        %322 = vadd.xlane.f32.xlu0 %v281
        %v323 = vpop.xlane.xlu0 %322
        %324 = vadd.xlane.f32.xlu0 %v282
        %v325 = vpop.xlane.xlu0 %324
        %326 = vadd.xlane.f32.xlu0 %v283
        %v327 = vpop.xlane.xlu0 %326
        %328 = vadd.xlane.f32.xlu0 %v284
        %v329 = vpop.xlane.xlu0 %328
        %330 = vadd.xlane.f32.xlu0 %v285
        %v331 = vpop.xlane.xlu0 %330
        %332 = vadd.xlane.f32.xlu0 %v286
        %v333 = vpop.xlane.xlu0 %332
        %334 = vadd.xlane.f32.xlu0 %v287
        %v335 = vpop.xlane.xlu0 %334
        %336 = vadd.xlane.f32.xlu0 %v288
        %v337 = vpop.xlane.xlu0 %336
        %338 = vadd.xlane.f32.xlu0 %v289
        %v339 = vpop.xlane.xlu0 %338
        %340 = vadd.xlane.f32.xlu0 %v290
        %v341 = vpop.xlane.xlu0 %340
        %342 = vadd.xlane.f32.xlu0 %v291
        %v343 = vpop.xlane.xlu0 %342
        %344 = vadd.xlane.f32.xlu0 %v292
        %v345 = vpop.xlane.xlu0 %344
        %346 = vadd.xlane.f32.xlu0 %v293
        %v347 = vpop.xlane.xlu0 %346
        %348 = vadd.xlane.f32.xlu0 %v294
        %v349 = vpop.xlane.xlu0 %348
        %350 = vadd.xlane.f32.xlu0 %v295
        %v351 = vpop.xlane.xlu0 %350
        %352 = vadd.xlane.f32.xlu0 %v296
        %v353 = vpop.xlane.xlu0 %352
        %354 = vadd.xlane.f32.xlu0 %v297
        %v355 = vpop.xlane.xlu0 %354
        %356 = vadd.xlane.f32.xlu0 %v298
        %v357 = vpop.xlane.xlu0 %356
        %358 = vadd.xlane.f32.xlu0 %v299
        %v359 = vpop.xlane.xlu0 %358
        %360 = vadd.xlane.f32.xlu0 %v300
        %v361 = vpop.xlane.xlu0 %360
        %362 = vadd.xlane.f32.xlu0 %v301
        %v363 = vpop.xlane.xlu0 %362
        %364 = vadd.xlane.f32.xlu0 %v302
        %v365 = vpop.xlane.xlu0 %364
        %366 = vadd.xlane.f32.xlu0 %v303
        %v367 = vpop.xlane.xlu0 %366
        %v368 = vrcp.pop 128.0
        %v369 = vmul.f32 %v305, %v368
        %v370 = vmul.f32 %v307, %v368
        %v371 = vmul.f32 %v309, %v368
        %v372 = vmul.f32 %v311, %v368
        %v373 = vmul.f32 %v313, %v368
        %v374 = vmul.f32 %v315, %v368
        %v375 = vmul.f32 %v317, %v368
        %v376 = vmul.f32 %v319, %v368
        %v377 = vmul.f32 %v321, %v368
        %v378 = vmul.f32 %v323, %v368
        %v379 = vmul.f32 %v325, %v368
        %v380 = vmul.f32 %v327, %v368
        %v381 = vmul.f32 %v329, %v368
        %v382 = vmul.f32 %v331, %v368
        %v383 = vmul.f32 %v333, %v368
        %v384 = vmul.f32 %v335, %v368
        %v385 = vmul.f32 %v337, %v368
        %v386 = vmul.f32 %v339, %v368
        %v387 = vmul.f32 %v341, %v368
        %v388 = vmul.f32 %v343, %v368
        %v389 = vmul.f32 %v345, %v368
        %v390 = vmul.f32 %v347, %v368
        %v391 = vmul.f32 %v349, %v368
        %v392 = vmul.f32 %v351, %v368
        %v393 = vmul.f32 %v353, %v368
        %v394 = vmul.f32 %v355, %v368
        %v395 = vmul.f32 %v357, %v368
        %v396 = vmul.f32 %v359, %v368
        %v397 = vmul.f32 %v361, %v368
        %v398 = vmul.f32 %v363, %v368
        %v399 = vmul.f32 %v365, %v368
        %v400 = vmul.f32 %v367, %v368
        %v401 = vsub.f32 %v272, %v369
        %v402 = vsub.f32 %v273, %v370
        %v403 = vsub.f32 %v274, %v371
        %v404 = vsub.f32 %v275, %v372
        %v405 = vsub.f32 %v276, %v373
        %v406 = vsub.f32 %v277, %v374
        %v407 = vsub.f32 %v278, %v375
        %v408 = vsub.f32 %v279, %v376
        %v409 = vsub.f32 %v280, %v377
        %v410 = vsub.f32 %v281, %v378
        %v411 = vsub.f32 %v282, %v379
        %v412 = vsub.f32 %v283, %v380
        %v413 = vsub.f32 %v284, %v381
        %v414 = vsub.f32 %v285, %v382
        %v415 = vsub.f32 %v286, %v383
        %v416 = vsub.f32 %v287, %v384
        %v417 = vsub.f32 %v288, %v385
        %v418 = vsub.f32 %v289, %v386
        %v419 = vsub.f32 %v290, %v387
        %v420 = vsub.f32 %v291, %v388
        %v421 = vsub.f32 %v292, %v389
        %v422 = vsub.f32 %v293, %v390
        %v423 = vsub.f32 %v294, %v391
        %v424 = vsub.f32 %v295, %v392
        %v425 = vsub.f32 %v296, %v393
        %v426 = vsub.f32 %v297, %v394
        %v427 = vsub.f32 %v298, %v395
        %v428 = vsub.f32 %v299, %v396
        %v429 = vsub.f32 %v300, %v397
        %v430 = vsub.f32 %v301, %v398
        %v431 = vsub.f32 %v302, %v399
        %v432 = vsub.f32 %v303, %v400
        %v433 = vmul.f32 %v401, %v401
        %v434 = vmul.f32 %v402, %v402
        %v435 = vmul.f32 %v403, %v403
        %v436 = vmul.f32 %v404, %v404
        %v437 = vmul.f32 %v405, %v405
        %v438 = vmul.f32 %v406, %v406
        %v439 = vmul.f32 %v407, %v407
        %v440 = vmul.f32 %v408, %v408
        %v441 = vmul.f32 %v409, %v409
        %v442 = vmul.f32 %v410, %v410
        %v443 = vmul.f32 %v411, %v411
        %v444 = vmul.f32 %v412, %v412
        %v445 = vmul.f32 %v413, %v413
        %v446 = vmul.f32 %v414, %v414
        %v447 = vmul.f32 %v415, %v415
        %v448 = vmul.f32 %v416, %v416
        %v449 = vmul.f32 %v417, %v417
        %v450 = vmul.f32 %v418, %v418
        %v451 = vmul.f32 %v419, %v419
        %v452 = vmul.f32 %v420, %v420
        %v453 = vmul.f32 %v421, %v421
        %v454 = vmul.f32 %v422, %v422
        %v455 = vmul.f32 %v423, %v423
        %v456 = vmul.f32 %v424, %v424
        %v457 = vmul.f32 %v425, %v425
        %v458 = vmul.f32 %v426, %v426
        %v459 = vmul.f32 %v427, %v427
        %v460 = vmul.f32 %v428, %v428
        %v461 = vmul.f32 %v429, %v429
        %v462 = vmul.f32 %v430, %v430
        %v463 = vmul.f32 %v431, %v431
        %v464 = vmul.f32 %v432, %v432
        %465 = vadd.xlane.f32.xlu0 %v433
        %v466 = vpop.xlane.xlu0 %465
        %467 = vadd.xlane.f32.xlu0 %v434
        %v468 = vpop.xlane.xlu0 %467
        %469 = vadd.xlane.f32.xlu0 %v435
        %v470 = vpop.xlane.xlu0 %469
        %471 = vadd.xlane.f32.xlu0 %v436
        %v472 = vpop.xlane.xlu0 %471
        %473 = vadd.xlane.f32.xlu0 %v437
        %v474 = vpop.xlane.xlu0 %473
        %475 = vadd.xlane.f32.xlu0 %v438
        %v476 = vpop.xlane.xlu0 %475
        %477 = vadd.xlane.f32.xlu0 %v439
        %v478 = vpop.xlane.xlu0 %477
        %479 = vadd.xlane.f32.xlu0 %v440
        %v480 = vpop.xlane.xlu0 %479
        %481 = vadd.xlane.f32.xlu0 %v441
        %v482 = vpop.xlane.xlu0 %481
        %483 = vadd.xlane.f32.xlu0 %v442
        %v484 = vpop.xlane.xlu0 %483
        %485 = vadd.xlane.f32.xlu0 %v443
        %v486 = vpop.xlane.xlu0 %485
        %487 = vadd.xlane.f32.xlu0 %v444
        %v488 = vpop.xlane.xlu0 %487
        %489 = vadd.xlane.f32.xlu0 %v445
        %v490 = vpop.xlane.xlu0 %489
        %491 = vadd.xlane.f32.xlu0 %v446
        %v492 = vpop.xlane.xlu0 %491
        %493 = vadd.xlane.f32.xlu0 %v447
        %v494 = vpop.xlane.xlu0 %493
        %495 = vadd.xlane.f32.xlu0 %v448
        %v496 = vpop.xlane.xlu0 %495
        %497 = vadd.xlane.f32.xlu0 %v449
        %v498 = vpop.xlane.xlu0 %497
        %499 = vadd.xlane.f32.xlu0 %v450
        %v500 = vpop.xlane.xlu0 %499
        %501 = vadd.xlane.f32.xlu0 %v451
        %v502 = vpop.xlane.xlu0 %501
        %503 = vadd.xlane.f32.xlu0 %v452
        %v504 = vpop.xlane.xlu0 %503
        %505 = vadd.xlane.f32.xlu0 %v453
        %v506 = vpop.xlane.xlu0 %505
        %507 = vadd.xlane.f32.xlu0 %v454
        %v508 = vpop.xlane.xlu0 %507
        %509 = vadd.xlane.f32.xlu0 %v455
        %v510 = vpop.xlane.xlu0 %509
        %511 = vadd.xlane.f32.xlu0 %v456
        %v512 = vpop.xlane.xlu0 %511
        %513 = vadd.xlane.f32.xlu0 %v457
        %v514 = vpop.xlane.xlu0 %513
        %515 = vadd.xlane.f32.xlu0 %v458
        %v516 = vpop.xlane.xlu0 %515
        %517 = vadd.xlane.f32.xlu0 %v459
        %v518 = vpop.xlane.xlu0 %517
        %519 = vadd.xlane.f32.xlu0 %v460
        %v520 = vpop.xlane.xlu0 %519
        %521 = vadd.xlane.f32.xlu0 %v461
        %v522 = vpop.xlane.xlu0 %521
        %523 = vadd.xlane.f32.xlu0 %v462
        %v524 = vpop.xlane.xlu0 %523
        %525 = vadd.xlane.f32.xlu0 %v463
        %v526 = vpop.xlane.xlu0 %525
        %527 = vadd.xlane.f32.xlu0 %v464
        %v528 = vpop.xlane.xlu0 %527
        %v529 = vmul.f32 %v466, %v368
        %v530 = vmul.f32 %v468, %v368
        %v531 = vmul.f32 %v470, %v368
        %v532 = vmul.f32 %v472, %v368
        %v533 = vmul.f32 %v474, %v368
        %v534 = vmul.f32 %v476, %v368
        %v535 = vmul.f32 %v478, %v368
        %v536 = vmul.f32 %v480, %v368
        %v537 = vmul.f32 %v482, %v368
        %v538 = vmul.f32 %v484, %v368
        %v539 = vmul.f32 %v486, %v368
        %v540 = vmul.f32 %v488, %v368
        %v541 = vmul.f32 %v490, %v368
        %v542 = vmul.f32 %v492, %v368
        %v543 = vmul.f32 %v494, %v368
        %v544 = vmul.f32 %v496, %v368
        %v545 = vmul.f32 %v498, %v368
        %v546 = vmul.f32 %v500, %v368
        %v547 = vmul.f32 %v502, %v368
        %v548 = vmul.f32 %v504, %v368
        %v549 = vmul.f32 %v506, %v368
        %v550 = vmul.f32 %v508, %v368
        %v551 = vmul.f32 %v510, %v368
        %v552 = vmul.f32 %v512, %v368
        %v553 = vmul.f32 %v514, %v368
        %v554 = vmul.f32 %v516, %v368
        %v555 = vmul.f32 %v518, %v368
        %v556 = vmul.f32 %v520, %v368
        %v557 = vmul.f32 %v522, %v368
        %v558 = vmul.f32 %v524, %v368
        %v559 = vmul.f32 %v526, %v368
        %v560 = vmul.f32 %v528, %v368
        %v561 = vadd.f32 %v529, 1e-06
        %v562 = vadd.f32 %v530, 1e-06
        %v563 = vadd.f32 %v531, 1e-06
        %v564 = vadd.f32 %v532, 1e-06
        %v565 = vadd.f32 %v533, 1e-06
        %v566 = vadd.f32 %v534, 1e-06
        %v567 = vadd.f32 %v535, 1e-06
        %v568 = vadd.f32 %v536, 1e-06
        %v569 = vadd.f32 %v537, 1e-06
        %v570 = vadd.f32 %v538, 1e-06
        %v571 = vadd.f32 %v539, 1e-06
        %v572 = vadd.f32 %v540, 1e-06
        %v573 = vadd.f32 %v541, 1e-06
        %v574 = vadd.f32 %v542, 1e-06
        %v575 = vadd.f32 %v543, 1e-06
        %v576 = vadd.f32 %v544, 1e-06
        %v577 = vadd.f32 %v545, 1e-06
        %v578 = vadd.f32 %v546, 1e-06
        %v579 = vadd.f32 %v547, 1e-06
        %v580 = vadd.f32 %v548, 1e-06
        %v581 = vadd.f32 %v549, 1e-06
        %v582 = vadd.f32 %v550, 1e-06
        %v583 = vadd.f32 %v551, 1e-06
        %v584 = vadd.f32 %v552, 1e-06
        %v585 = vadd.f32 %v553, 1e-06
        %v586 = vadd.f32 %v554, 1e-06
        %v587 = vadd.f32 %v555, 1e-06
        %v588 = vadd.f32 %v556, 1e-06
        %v589 = vadd.f32 %v557, 1e-06
        %v590 = vadd.f32 %v558, 1e-06
        %v591 = vadd.f32 %v559, 1e-06
        %v592 = vadd.f32 %v560, 1e-06
        %v593 = vrsqrt.pop %v561
        %v594 = vrsqrt.pop %v562
        %v595 = vrsqrt.pop %v563
        %v596 = vrsqrt.pop %v564
        %v597 = vrsqrt.pop %v565
        %v598 = vrsqrt.pop %v566
        %v599 = vrsqrt.pop %v567
        %v600 = vrsqrt.pop %v568
        %v601 = vrsqrt.pop %v569
        %v602 = vrsqrt.pop %v570
        %v603 = vrsqrt.pop %v571
        %v604 = vrsqrt.pop %v572
        %v605 = vrsqrt.pop %v573
        %v606 = vrsqrt.pop %v574
        %v607 = vrsqrt.pop %v575
        %v608 = vrsqrt.pop %v576
        %v609 = vrsqrt.pop %v577
        %v610 = vrsqrt.pop %v578
        %v611 = vrsqrt.pop %v579
        %v612 = vrsqrt.pop %v580
        %v613 = vrsqrt.pop %v581
        %v614 = vrsqrt.pop %v582
        %v615 = vrsqrt.pop %v583
        %v616 = vrsqrt.pop %v584
        %v617 = vrsqrt.pop %v585
        %v618 = vrsqrt.pop %v586
        %v619 = vrsqrt.pop %v587
        %v620 = vrsqrt.pop %v588
        %v621 = vrsqrt.pop %v589
        %v622 = vrsqrt.pop %v590
        %v623 = vrsqrt.pop %v591
        %v624 = vrsqrt.pop %v592
        %v625 = vmul.f32 %v401, %v593
        %v626 = vmul.f32 %v402, %v594
        %v627 = vmul.f32 %v403, %v595
        %v628 = vmul.f32 %v404, %v596
        %v629 = vmul.f32 %v405, %v597
        %v630 = vmul.f32 %v406, %v598
        %v631 = vmul.f32 %v407, %v599
        %v632 = vmul.f32 %v408, %v600
        %v633 = vmul.f32 %v409, %v601
        %v634 = vmul.f32 %v410, %v602
        %v635 = vmul.f32 %v411, %v603
        %v636 = vmul.f32 %v412, %v604
        %v637 = vmul.f32 %v413, %v605
        %v638 = vmul.f32 %v414, %v606
        %v639 = vmul.f32 %v415, %v607
        %v640 = vmul.f32 %v416, %v608
        %v641 = vmul.f32 %v417, %v609
        %v642 = vmul.f32 %v418, %v610
        %v643 = vmul.f32 %v419, %v611
        %v644 = vmul.f32 %v420, %v612
        %v645 = vmul.f32 %v421, %v613
        %v646 = vmul.f32 %v422, %v614
        %v647 = vmul.f32 %v423, %v615
        %v648 = vmul.f32 %v424, %v616
        %v649 = vmul.f32 %v425, %v617
        %v650 = vmul.f32 %v426, %v618
        %v651 = vmul.f32 %v427, %v619
        %v652 = vmul.f32 %v428, %v620
        %v653 = vmul.f32 %v429, %v621
        %v654 = vmul.f32 %v430, %v622
        %v655 = vmul.f32 %v431, %v623
        %v656 = vmul.f32 %v432, %v624
        %v657 = vld [vmem:[%s1] sm:$0x1]
        %v659 = vlaneseq
        %v660 = vshrl.u32 %v659, 7
        %v661 = vsub.s32 0, %v660
        %v662 = vrot.slane %v657, %v661
        %v664 = vmul.f32 %v625, %v662
        %v665 = vmul.f32 %v626, %v662
        %v666 = vmul.f32 %v627, %v662
        %v667 = vmul.f32 %v628, %v662
        %v668 = vmul.f32 %v629, %v662
        %v669 = vmul.f32 %v630, %v662
        %v670 = vmul.f32 %v631, %v662
        %v671 = vmul.f32 %v632, %v662
        %v672 = vmul.f32 %v633, %v662
        %v673 = vmul.f32 %v634, %v662
        %v674 = vmul.f32 %v635, %v662
        %v675 = vmul.f32 %v636, %v662
        %v676 = vmul.f32 %v637, %v662
        %v677 = vmul.f32 %v638, %v662
        %v678 = vmul.f32 %v639, %v662
        %v679 = vmul.f32 %v640, %v662
        %v680 = vmul.f32 %v641, %v662
        %v681 = vmul.f32 %v642, %v662
        %v682 = vmul.f32 %v643, %v662
        %v683 = vmul.f32 %v644, %v662
        %v684 = vmul.f32 %v645, %v662
        %v685 = vmul.f32 %v646, %v662
        %v686 = vmul.f32 %v647, %v662
        %v687 = vmul.f32 %v648, %v662
        %v688 = vmul.f32 %v649, %v662
        %v689 = vmul.f32 %v650, %v662
        %v690 = vmul.f32 %v651, %v662
        %v691 = vmul.f32 %v652, %v662
        %v692 = vmul.f32 %v653, %v662
        %v693 = vmul.f32 %v654, %v662
        %v694 = vmul.f32 %v655, %v662
        %v695 = vmul.f32 %v656, %v662
        %v696 = vld [vmem:[%s2] sm:$0x1]
        %v698 = vlaneseq
        %v699 = vshrl.u32 %v698, 7
        %v700 = vsub.s32 0, %v699
        %v701 = vrot.slane %v696, %v700
        %v703 = vadd.f32 %v664, %v701
        %v704 = vadd.f32 %v665, %v701
        %v705 = vadd.f32 %v666, %v701
        %v706 = vadd.f32 %v667, %v701
        %v707 = vadd.f32 %v668, %v701
        %v708 = vadd.f32 %v669, %v701
        %v709 = vadd.f32 %v670, %v701
        %v710 = vadd.f32 %v671, %v701
        %v711 = vadd.f32 %v672, %v701
        %v712 = vadd.f32 %v673, %v701
        %v713 = vadd.f32 %v674, %v701
        %v714 = vadd.f32 %v675, %v701
        %v715 = vadd.f32 %v676, %v701
        %v716 = vadd.f32 %v677, %v701
        %v717 = vadd.f32 %v678, %v701
        %v718 = vadd.f32 %v679, %v701
        %v719 = vadd.f32 %v680, %v701
        %v720 = vadd.f32 %v681, %v701
        %v721 = vadd.f32 %v682, %v701
        %v722 = vadd.f32 %v683, %v701
        %v723 = vadd.f32 %v684, %v701
        %v724 = vadd.f32 %v685, %v701
        %v725 = vadd.f32 %v686, %v701
        %v726 = vadd.f32 %v687, %v701
        %v727 = vadd.f32 %v688, %v701
        %v728 = vadd.f32 %v689, %v701
        %v729 = vadd.f32 %v690, %v701
        %v730 = vadd.f32 %v691, %v701
        %v731 = vadd.f32 %v692, %v701
        %v732 = vadd.f32 %v693, %v701
        %v733 = vadd.f32 %v694, %v701
        %v734 = vadd.f32 %v695, %v701
        %735 = vst [vmem:[%s261] sm:$0xff] %v703
        %736 = vst [vmem:[%s261 + $0x8] sm:$0xff] %v704
        %737 = vst [vmem:[%s261 + $0x10] sm:$0xff] %v705
        %738 = vst [vmem:[%s261 + $0x18] sm:$0xff] %v706
        %739 = vst [vmem:[%s261 + $0x20] sm:$0xff] %v707
        %740 = vst [vmem:[%s261 + $0x28] sm:$0xff] %v708
        %741 = vst [vmem:[%s261 + $0x30] sm:$0xff] %v709
        %742 = vst [vmem:[%s261 + $0x38] sm:$0xff] %v710
        %743 = vst [vmem:[%s261 + $0x40] sm:$0xff] %v711
        %744 = vst [vmem:[%s261 + $0x48] sm:$0xff] %v712
        %745 = vst [vmem:[%s261 + $0x50] sm:$0xff] %v713
        %746 = vst [vmem:[%s261 + $0x58] sm:$0xff] %v714
        %747 = vst [vmem:[%s261 + $0x60] sm:$0xff] %v715
        %748 = vst [vmem:[%s261 + $0x68] sm:$0xff] %v716
        %749 = vst [vmem:[%s261 + $0x70] sm:$0xff] %v717
        %750 = vst [vmem:[%s261 + $0x78] sm:$0xff] %v718
        %751 = vst [vmem:[%s261 + $0x80] sm:$0xff] %v719
        %752 = vst [vmem:[%s261 + $0x88] sm:$0xff] %v720
        %753 = vst [vmem:[%s261 + $0x90] sm:$0xff] %v721
        %754 = vst [vmem:[%s261 + $0x98] sm:$0xff] %v722
        %755 = vst [vmem:[%s261 + $0xa0] sm:$0xff] %v723
        %756 = vst [vmem:[%s261 + $0xa8] sm:$0xff] %v724
        %757 = vst [vmem:[%s261 + $0xb0] sm:$0xff] %v725
        %758 = vst [vmem:[%s261 + $0xb8] sm:$0xff] %v726
        %759 = vst [vmem:[%s261 + $0xc0] sm:$0xff] %v727
        %760 = vst [vmem:[%s261 + $0xc8] sm:$0xff] %v728
        %761 = vst [vmem:[%s261 + $0xd0] sm:$0xff] %v729
        %762 = vst [vmem:[%s261 + $0xd8] sm:$0xff] %v730
        %763 = vst [vmem:[%s261 + $0xe0] sm:$0xff] %v731
        %764 = vst [vmem:[%s261 + $0xe8] sm:$0xff] %v732
        %765 = vst [vmem:[%s261 + $0xf0] sm:$0xff] %v733
        %766 = vst [vmem:[%s261 + $0xf8] sm:$0xff] %v734
        %v767 = vld [vmem:[#allocation5] sm:$0xff]
        %v768 = vld [vmem:[#allocation5 + $0x8] sm:$0xff]
        %v769 = vld [vmem:[#allocation5 + $0x10] sm:$0xff]
        %v770 = vld [vmem:[#allocation5 + $0x18] sm:$0xff]
        %v771 = vld [vmem:[#allocation5 + $0x20] sm:$0xff]
        %v772 = vld [vmem:[#allocation5 + $0x28] sm:$0xff]
        %v773 = vld [vmem:[#allocation5 + $0x30] sm:$0xff]
        %v774 = vld [vmem:[#allocation5 + $0x38] sm:$0xff]
        %v775 = vld [vmem:[#allocation5 + $0x40] sm:$0xff]
        %v776 = vld [vmem:[#allocation5 + $0x48] sm:$0xff]
        %v777 = vld [vmem:[#allocation5 + $0x50] sm:$0xff]
        %v778 = vld [vmem:[#allocation5 + $0x58] sm:$0xff]
        %v779 = vld [vmem:[#allocation5 + $0x60] sm:$0xff]
        %v780 = vld [vmem:[#allocation5 + $0x68] sm:$0xff]
        %v781 = vld [vmem:[#allocation5 + $0x70] sm:$0xff]
        %v782 = vld [vmem:[#allocation5 + $0x78] sm:$0xff]
        %v783 = vld [vmem:[#allocation5 + $0x80] sm:$0xff]
        %v784 = vld [vmem:[#allocation5 + $0x88] sm:$0xff]
        %v785 = vld [vmem:[#allocation5 + $0x90] sm:$0xff]
        %v786 = vld [vmem:[#allocation5 + $0x98] sm:$0xff]
        %v787 = vld [vmem:[#allocation5 + $0xa0] sm:$0xff]
        %v788 = vld [vmem:[#allocation5 + $0xa8] sm:$0xff]
        %v789 = vld [vmem:[#allocation5 + $0xb0] sm:$0xff]
        %v790 = vld [vmem:[#allocation5 + $0xb8] sm:$0xff]
        %v791 = vld [vmem:[#allocation5 + $0xc0] sm:$0xff]
        %v792 = vld [vmem:[#allocation5 + $0xc8] sm:$0xff]
        %v793 = vld [vmem:[#allocation5 + $0xd0] sm:$0xff]
        %v794 = vld [vmem:[#allocation5 + $0xd8] sm:$0xff]
        %v795 = vld [vmem:[#allocation5 + $0xe0] sm:$0xff]
        %v796 = vld [vmem:[#allocation5 + $0xe8] sm:$0xff]
        %v797 = vld [vmem:[#allocation5 + $0xf0] sm:$0xff]
        %v798 = vld [vmem:[#allocation5 + $0xf8] sm:$0xff]
        %v799 = vld [vmem:[#allocation5 + $0x100] sm:$0xff]
        %v800 = vld [vmem:[#allocation5 + $0x108] sm:$0xff]
        %v801 = vld [vmem:[#allocation5 + $0x110] sm:$0xff]
        %v802 = vld [vmem:[#allocation5 + $0x118] sm:$0xff]
        %v803 = vld [vmem:[#allocation5 + $0x120] sm:$0xff]
        %v804 = vld [vmem:[#allocation5 + $0x128] sm:$0xff]
        %v805 = vld [vmem:[#allocation5 + $0x130] sm:$0xff]
        %v806 = vld [vmem:[#allocation5 + $0x138] sm:$0xff]
        %v807 = vld [vmem:[#allocation5 + $0x140] sm:$0xff]
        %v808 = vld [vmem:[#allocation5 + $0x148] sm:$0xff]
        %v809 = vld [vmem:[#allocation5 + $0x150] sm:$0xff]
        %v810 = vld [vmem:[#allocation5 + $0x158] sm:$0xff]
        %v811 = vld [vmem:[#allocation5 + $0x160] sm:$0xff]
        %v812 = vld [vmem:[#allocation5 + $0x168] sm:$0xff]
        %v813 = vld [vmem:[#allocation5 + $0x170] sm:$0xff]
        %v814 = vld [vmem:[#allocation5 + $0x178] sm:$0xff]
        %v815 = vld [vmem:[#allocation5 + $0x180] sm:$0xff]
        %v816 = vld [vmem:[#allocation5 + $0x188] sm:$0xff]
        %v817 = vld [vmem:[#allocation5 + $0x190] sm:$0xff]
        %v818 = vld [vmem:[#allocation5 + $0x198] sm:$0xff]
        %v819 = vld [vmem:[#allocation5 + $0x1a0] sm:$0xff]
        %v820 = vld [vmem:[#allocation5 + $0x1a8] sm:$0xff]
        %v821 = vld [vmem:[#allocation5 + $0x1b0] sm:$0xff]
        %v822 = vld [vmem:[#allocation5 + $0x1b8] sm:$0xff]
        %v823 = vld [vmem:[#allocation5 + $0x1c0] sm:$0xff]
        %v824 = vld [vmem:[#allocation5 + $0x1c8] sm:$0xff]
        %v825 = vld [vmem:[#allocation5 + $0x1d0] sm:$0xff]
        %v826 = vld [vmem:[#allocation5 + $0x1d8] sm:$0xff]
        %v827 = vld [vmem:[#allocation5 + $0x1e0] sm:$0xff]
        %v828 = vld [vmem:[#allocation5 + $0x1e8] sm:$0xff]
        %v829 = vld [vmem:[#allocation5 + $0x1f0] sm:$0xff]
        %v830 = vld [vmem:[#allocation5 + $0x1f8] sm:$0xff]
        %831 = vmatprep.subr.mxu0 %v828
        %832 = vmatpush1.msra.mxu0 %v827
        %833 = vmatprep.subr.mxu0 %v824
        %834 = vmatpush1.msra.mxu0 %v823
        %835 = vmatprep.subr.mxu0 %v820
        %836 = vmatpush1.msra.mxu0 %v819
        %837 = vmatprep.subr.mxu0 %v816
        %838 = vmatpush1.msra.mxu0 %v815
        %839 = vmatprep.subr.mxu0 %v812
        %840 = vmatpush1.msra.mxu0 %v811
        %841 = vmatprep.subr.mxu0 %v808
        %842 = vmatpush1.msra.mxu0 %v807
        %843 = vmatprep.subr.mxu0 %v804
        %844 = vmatpush1.msra.mxu0 %v803
        %845 = vmatprep.subr.mxu0 %v800
        %846 = vmatpush1.msra.mxu0 %v799
        %847 = vmatprep.subr.mxu0 %v796
        %848 = vmatpush1.msra.mxu0 %v795
        %849 = vmatprep.subr.mxu0 %v792
        %850 = vmatpush1.msra.mxu0 %v791
        %851 = vmatprep.subr.mxu0 %v788
        %852 = vmatpush1.msra.mxu0 %v787
        %853 = vmatprep.subr.mxu0 %v784
        %854 = vmatpush1.msra.mxu0 %v783
        %855 = vmatprep.subr.mxu0 %v780
        %856 = vmatpush1.msra.mxu0 %v779
        %857 = vmatprep.subr.mxu0 %v776
        %858 = vmatpush1.msra.mxu0 %v775
        %859 = vmatprep.subr.mxu0 %v772
        %860 = vmatpush1.msra.mxu0 %v771
        %861 = vmatprep.subr.mxu0 %v768
        %862 = vmatpush1.msra.mxu0 %v767
        %863 = vmatprep.subr.mxu0 0.0
        %864 = vmatpush2.msra.mxu0 0.0
        %865 = vmatprep.subr.mxu0 0.0
        %866 = vmatpush2.msra.mxu0 0.0
        %867 = vmatprep.subr.mxu0 0.0
        %868 = vmatpush2.msra.mxu0 0.0
        %869 = vmatprep.subr.mxu0 0.0
        %870 = vmatpush2.msra.mxu0 0.0
        %871 = vmatprep.subr.mxu0 0.0
        %872 = vmatpush2.msra.mxu0 0.0
        %873 = vmatprep.subr.mxu0 0.0
        %874 = vmatpush2.msra.mxu0 0.0
        %875 = vmatprep.subr.mxu0 0.0
        %876 = vmatpush2.msra.mxu0 0.0
        %877 = vmatprep.subr.mxu0 0.0
        %878 = vmatpush2.msra.mxu0 0.0
        %879 = vmatprep.subr.mxu0 0.0
        %880 = vmatpush2.msra.mxu0 0.0
        %881 = vmatprep.subr.mxu0 0.0
        %882 = vmatpush2.msra.mxu0 0.0
        %883 = vmatprep.subr.mxu0 0.0
        %884 = vmatpush2.msra.mxu0 0.0
        %885 = vmatprep.subr.mxu0 0.0
        %886 = vmatpush2.msra.mxu0 0.0
        %887 = vmatprep.subr.mxu0 0.0
        %888 = vmatpush2.msra.mxu0 0.0
        %889 = vmatprep.subr.mxu0 0.0
        %890 = vmatpush2.msra.mxu0 0.0
        %891 = vmatprep.subr.mxu0 0.0
        %892 = vmatpush2.msra.mxu0 0.0
        %893 = vmatprep.subr.mxu0 0.0
        %894 = vmatpush2.msra.mxu0 0.0
        %895 = vmatprep.mubr.f32.mxu0 0.0
        %896 = vmatmul.mubr.f32.gmra.mxu0 %v703
        %v897 = vpop.f32.mrf.mxu0
        %v898 = vadd.f32 0.0, %v897
        %v899 = vpop.f32.mrf.mxu0
        %v900 = vadd.f32 0.0, %v899
        %901 = vmatprep.mubr.f32.mxu0 0.0
        %902 = vmatmul.mubr.f32.gmra.mxu0 %v704
        %v903 = vpop.f32.mrf.mxu0
        %v904 = vadd.f32 0.0, %v903
        %v905 = vpop.f32.mrf.mxu0
        %v906 = vadd.f32 0.0, %v905
        %907 = vmatprep.mubr.f32.mxu0 0.0
        %908 = vmatmul.mubr.f32.gmra.mxu0 %v705
        %v909 = vpop.f32.mrf.mxu0
        %v910 = vadd.f32 0.0, %v909
        %v911 = vpop.f32.mrf.mxu0
        %v912 = vadd.f32 0.0, %v911
        %913 = vmatprep.mubr.f32.mxu0 0.0
        %914 = vmatmul.mubr.f32.gmra.mxu0 %v706
        %v915 = vpop.f32.mrf.mxu0
        %v916 = vadd.f32 0.0, %v915
        %v917 = vpop.f32.mrf.mxu0
        %v918 = vadd.f32 0.0, %v917
        %919 = vmatprep.mubr.f32.mxu0 0.0
        %920 = vmatmul.mubr.f32.gmra.mxu0 %v707
        %v921 = vpop.f32.mrf.mxu0
        %v922 = vadd.f32 0.0, %v921
        %v923 = vpop.f32.mrf.mxu0
        %v924 = vadd.f32 0.0, %v923
        %925 = vmatprep.mubr.f32.mxu0 0.0
        %926 = vmatmul.mubr.f32.gmra.mxu0 %v708
        %v927 = vpop.f32.mrf.mxu0
        %v928 = vadd.f32 0.0, %v927
        %v929 = vpop.f32.mrf.mxu0
        %v930 = vadd.f32 0.0, %v929
        %931 = vmatprep.mubr.f32.mxu0 0.0
        %932 = vmatmul.mubr.f32.gmra.mxu0 %v709
        %v933 = vpop.f32.mrf.mxu0
        %v934 = vadd.f32 0.0, %v933
        %v935 = vpop.f32.mrf.mxu0
        %v936 = vadd.f32 0.0, %v935
        %937 = vmatprep.mubr.f32.mxu0 0.0
        %938 = vmatmul.mubr.f32.gmra.mxu0 %v710
        %v939 = vpop.f32.mrf.mxu0
        %v940 = vadd.f32 0.0, %v939
        %v941 = vpop.f32.mrf.mxu0
        %v942 = vadd.f32 0.0, %v941
        %943 = vmatprep.mubr.f32.mxu0 0.0
        %944 = vmatmul.mubr.f32.gmra.mxu0 %v711
        %v945 = vpop.f32.mrf.mxu0
        %v946 = vadd.f32 0.0, %v945
        %v947 = vpop.f32.mrf.mxu0
        %v948 = vadd.f32 0.0, %v947
        %949 = vmatprep.mubr.f32.mxu0 0.0
        %950 = vmatmul.mubr.f32.gmra.mxu0 %v712
        %v951 = vpop.f32.mrf.mxu0
        %v952 = vadd.f32 0.0, %v951
        %v953 = vpop.f32.mrf.mxu0
        %v954 = vadd.f32 0.0, %v953
        %955 = vmatprep.mubr.f32.mxu0 0.0
        %956 = vmatmul.mubr.f32.gmra.mxu0 %v713
        %v957 = vpop.f32.mrf.mxu0
        %v958 = vadd.f32 0.0, %v957
        %v959 = vpop.f32.mrf.mxu0
        %v960 = vadd.f32 0.0, %v959
        %961 = vmatprep.mubr.f32.mxu0 0.0
        %962 = vmatmul.mubr.f32.gmra.mxu0 %v714
        %v963 = vpop.f32.mrf.mxu0
        %v964 = vadd.f32 0.0, %v963
        %v965 = vpop.f32.mrf.mxu0
        %v966 = vadd.f32 0.0, %v965
        %967 = vmatprep.mubr.f32.mxu0 0.0
        %968 = vmatmul.mubr.f32.gmra.mxu0 %v715
        %v969 = vpop.f32.mrf.mxu0
        %v970 = vadd.f32 0.0, %v969
        %v971 = vpop.f32.mrf.mxu0
        %v972 = vadd.f32 0.0, %v971
        %973 = vmatprep.mubr.f32.mxu0 0.0
        %974 = vmatmul.mubr.f32.gmra.mxu0 %v716
        %v975 = vpop.f32.mrf.mxu0
        %v976 = vadd.f32 0.0, %v975
        %v977 = vpop.f32.mrf.mxu0
        %v978 = vadd.f32 0.0, %v977
        %979 = vmatprep.mubr.f32.mxu0 0.0
        %980 = vmatmul.mubr.f32.gmra.mxu0 %v717
        %v981 = vpop.f32.mrf.mxu0
        %v982 = vadd.f32 0.0, %v981
        %v983 = vpop.f32.mrf.mxu0
        %v984 = vadd.f32 0.0, %v983
        %985 = vmatprep.mubr.f32.mxu0 0.0
        %986 = vmatmul.mubr.f32.gmra.mxu0 %v718
        %v987 = vpop.f32.mrf.mxu0
        %v988 = vadd.f32 0.0, %v987
        %v989 = vpop.f32.mrf.mxu0
        %v990 = vadd.f32 0.0, %v989
        %991 = vmatprep.mubr.f32.mxu0 0.0
        %992 = vmatmul.mubr.f32.gmra.mxu0 %v719
        %v993 = vpop.f32.mrf.mxu0
        %v994 = vadd.f32 0.0, %v993
        %v995 = vpop.f32.mrf.mxu0
        %v996 = vadd.f32 0.0, %v995
        %997 = vmatprep.mubr.f32.mxu0 0.0
        %998 = vmatmul.mubr.f32.gmra.mxu0 %v720
        %v999 = vpop.f32.mrf.mxu0
        %v1000 = vadd.f32 0.0, %v999
        %v1001 = vpop.f32.mrf.mxu0
        %v1002 = vadd.f32 0.0, %v1001
        %1003 = vmatprep.mubr.f32.mxu0 0.0
        %1004 = vmatmul.mubr.f32.gmra.mxu0 %v721
        %v1005 = vpop.f32.mrf.mxu0
        %v1006 = vadd.f32 0.0, %v1005
        %v1007 = vpop.f32.mrf.mxu0
        %v1008 = vadd.f32 0.0, %v1007
        %1009 = vmatprep.mubr.f32.mxu0 0.0
        %1010 = vmatmul.mubr.f32.gmra.mxu0 %v722
        %v1011 = vpop.f32.mrf.mxu0
        %v1012 = vadd.f32 0.0, %v1011
        %v1013 = vpop.f32.mrf.mxu0
        %v1014 = vadd.f32 0.0, %v1013
        %1015 = vmatprep.mubr.f32.mxu0 0.0
        %1016 = vmatmul.mubr.f32.gmra.mxu0 %v723
        %v1017 = vpop.f32.mrf.mxu0
        %v1018 = vadd.f32 0.0, %v1017
        %v1019 = vpop.f32.mrf.mxu0
        %v1020 = vadd.f32 0.0, %v1019
        %1021 = vmatprep.mubr.f32.mxu0 0.0
        %1022 = vmatmul.mubr.f32.gmra.mxu0 %v724
        %v1023 = vpop.f32.mrf.mxu0
        %v1024 = vadd.f32 0.0, %v1023
        %v1025 = vpop.f32.mrf.mxu0
        %v1026 = vadd.f32 0.0, %v1025
        %1027 = vmatprep.mubr.f32.mxu0 0.0
        %1028 = vmatmul.mubr.f32.gmra.mxu0 %v725
        %v1029 = vpop.f32.mrf.mxu0
        %v1030 = vadd.f32 0.0, %v1029
        %v1031 = vpop.f32.mrf.mxu0
        %v1032 = vadd.f32 0.0, %v1031
        %1033 = vmatprep.mubr.f32.mxu0 0.0
        %1034 = vmatmul.mubr.f32.gmra.mxu0 %v726
        %v1035 = vpop.f32.mrf.mxu0
        %v1036 = vadd.f32 0.0, %v1035
        %v1037 = vpop.f32.mrf.mxu0
        %v1038 = vadd.f32 0.0, %v1037
        %1039 = vmatprep.mubr.f32.mxu0 0.0
        %1040 = vmatmul.mubr.f32.gmra.mxu0 %v727
        %v1041 = vpop.f32.mrf.mxu0
        %v1042 = vadd.f32 0.0, %v1041
        %v1043 = vpop.f32.mrf.mxu0
        %v1044 = vadd.f32 0.0, %v1043
        %1045 = vmatprep.mubr.f32.mxu0 0.0
        %1046 = vmatmul.mubr.f32.gmra.mxu0 %v728
        %v1047 = vpop.f32.mrf.mxu0
        %v1048 = vadd.f32 0.0, %v1047
        %v1049 = vpop.f32.mrf.mxu0
        %v1050 = vadd.f32 0.0, %v1049
        %1051 = vmatprep.mubr.f32.mxu0 0.0
        %1052 = vmatmul.mubr.f32.gmra.mxu0 %v729
        %v1053 = vpop.f32.mrf.mxu0
        %v1054 = vadd.f32 0.0, %v1053
        %v1055 = vpop.f32.mrf.mxu0
        %v1056 = vadd.f32 0.0, %v1055
        %1057 = vmatprep.mubr.f32.mxu0 0.0
        %1058 = vmatmul.mubr.f32.gmra.mxu0 %v730
        %v1059 = vpop.f32.mrf.mxu0
        %v1060 = vadd.f32 0.0, %v1059
        %v1061 = vpop.f32.mrf.mxu0
        %v1062 = vadd.f32 0.0, %v1061
        %1063 = vmatprep.mubr.f32.mxu0 0.0
        %1064 = vmatmul.mubr.f32.gmra.mxu0 %v731
        %v1065 = vpop.f32.mrf.mxu0
        %v1066 = vadd.f32 0.0, %v1065
        %v1067 = vpop.f32.mrf.mxu0
        %v1068 = vadd.f32 0.0, %v1067
        %1069 = vmatprep.mubr.f32.mxu0 0.0
        %1070 = vmatmul.mubr.f32.gmra.mxu0 %v732
        %v1071 = vpop.f32.mrf.mxu0
        %v1072 = vadd.f32 0.0, %v1071
        %v1073 = vpop.f32.mrf.mxu0
        %v1074 = vadd.f32 0.0, %v1073
        %1075 = vmatprep.mubr.f32.mxu0 0.0
        %1076 = vmatmul.mubr.f32.gmra.mxu0 %v733
        %v1077 = vpop.f32.mrf.mxu0
        %v1078 = vadd.f32 0.0, %v1077
        %v1079 = vpop.f32.mrf.mxu0
        %v1080 = vadd.f32 0.0, %v1079
        %1081 = vmatprep.mubr.f32.mxu0 0.0
        %1082 = vmatmul.mubr.f32.gmra.mxu0 %v734
        %v1083 = vpop.f32.mrf.mxu0
        %v1084 = vadd.f32 0.0, %v1083
        %v1085 = vpop.f32.mrf.mxu0
        %v1086 = vadd.f32 0.0, %v1085
        %1087 = vdwg.mxu0
        %1088 = vmatprep.subr.mxu0 %v830
        %1089 = vmatpush1.msra.mxu0 %v829
        %1090 = vmatprep.subr.mxu0 %v826
        %1091 = vmatpush1.msra.mxu0 %v825
        %1092 = vmatprep.subr.mxu0 %v822
        %1093 = vmatpush1.msra.mxu0 %v821
        %1094 = vmatprep.subr.mxu0 %v818
        %1095 = vmatpush1.msra.mxu0 %v817
        %1096 = vmatprep.subr.mxu0 %v814
        %1097 = vmatpush1.msra.mxu0 %v813
        %1098 = vmatprep.subr.mxu0 %v810
        %1099 = vmatpush1.msra.mxu0 %v809
        %1100 = vmatprep.subr.mxu0 %v806
        %1101 = vmatpush1.msra.mxu0 %v805
        %1102 = vmatprep.subr.mxu0 %v802
        %1103 = vmatpush1.msra.mxu0 %v801
        %1104 = vmatprep.subr.mxu0 %v798
        %1105 = vmatpush1.msra.mxu0 %v797
        %1106 = vmatprep.subr.mxu0 %v794
        %1107 = vmatpush1.msra.mxu0 %v793
        %1108 = vmatprep.subr.mxu0 %v790
        %1109 = vmatpush1.msra.mxu0 %v789
        %1110 = vmatprep.subr.mxu0 %v786
        %1111 = vmatpush1.msra.mxu0 %v785
        %1112 = vmatprep.subr.mxu0 %v782
        %1113 = vmatpush1.msra.mxu0 %v781
        %1114 = vmatprep.subr.mxu0 %v778
        %1115 = vmatpush1.msra.mxu0 %v777
        %1116 = vmatprep.subr.mxu0 %v774
        %1117 = vmatpush1.msra.mxu0 %v773
        %1118 = vmatprep.subr.mxu0 %v770
        %1119 = vmatpush1.msra.mxu0 %v769
        %1120 = vmatprep.subr.mxu0 0.0
        %1121 = vmatpush2.msra.mxu0 0.0
        %1122 = vmatprep.subr.mxu0 0.0
        %1123 = vmatpush2.msra.mxu0 0.0
        %1124 = vmatprep.subr.mxu0 0.0
        %1125 = vmatpush2.msra.mxu0 0.0
        %1126 = vmatprep.subr.mxu0 0.0
        %1127 = vmatpush2.msra.mxu0 0.0
        %1128 = vmatprep.subr.mxu0 0.0
        %1129 = vmatpush2.msra.mxu0 0.0
        %1130 = vmatprep.subr.mxu0 0.0
        %1131 = vmatpush2.msra.mxu0 0.0
        %1132 = vmatprep.subr.mxu0 0.0
        %1133 = vmatpush2.msra.mxu0 0.0
        %1134 = vmatprep.subr.mxu0 0.0
        %1135 = vmatpush2.msra.mxu0 0.0
        %1136 = vmatprep.subr.mxu0 0.0
        %1137 = vmatpush2.msra.mxu0 0.0
        %1138 = vmatprep.subr.mxu0 0.0
        %1139 = vmatpush2.msra.mxu0 0.0
        %1140 = vmatprep.subr.mxu0 0.0
        %1141 = vmatpush2.msra.mxu0 0.0
        %1142 = vmatprep.subr.mxu0 0.0
        %1143 = vmatpush2.msra.mxu0 0.0
        %1144 = vmatprep.subr.mxu0 0.0
        %1145 = vmatpush2.msra.mxu0 0.0
        %1146 = vmatprep.subr.mxu0 0.0
        %1147 = vmatpush2.msra.mxu0 0.0
        %1148 = vmatprep.subr.mxu0 0.0
        %1149 = vmatpush2.msra.mxu0 0.0
        %1150 = vmatprep.subr.mxu0 0.0
        %1151 = vmatpush2.msra.mxu0 0.0
        %1152 = vmatprep.mubr.f32.mxu0 0.0
        %1153 = vmatmul.mubr.f32.gmra.mxu0 %v703
        %v1154 = vpop.f32.mrf.mxu0
        %v1155 = vadd.f32 0.0, %v1154
        %v1156 = vpop.f32.mrf.mxu0
        %v1157 = vadd.f32 0.0, %v1156
        %1158 = vmatprep.mubr.f32.mxu0 0.0
        %1159 = vmatmul.mubr.f32.gmra.mxu0 %v704
        %v1160 = vpop.f32.mrf.mxu0
        %v1161 = vadd.f32 0.0, %v1160
        %v1162 = vpop.f32.mrf.mxu0
        %v1163 = vadd.f32 0.0, %v1162
        %1164 = vmatprep.mubr.f32.mxu0 0.0
        %1165 = vmatmul.mubr.f32.gmra.mxu0 %v705
        %v1166 = vpop.f32.mrf.mxu0
        %v1167 = vadd.f32 0.0, %v1166
        %v1168 = vpop.f32.mrf.mxu0
        %v1169 = vadd.f32 0.0, %v1168
        %1170 = vmatprep.mubr.f32.mxu0 0.0
        %1171 = vmatmul.mubr.f32.gmra.mxu0 %v706
        %v1172 = vpop.f32.mrf.mxu0
        %v1173 = vadd.f32 0.0, %v1172
        %v1174 = vpop.f32.mrf.mxu0
        %v1175 = vadd.f32 0.0, %v1174
        %1176 = vmatprep.mubr.f32.mxu0 0.0
        %1177 = vmatmul.mubr.f32.gmra.mxu0 %v707
        %v1178 = vpop.f32.mrf.mxu0
        %v1179 = vadd.f32 0.0, %v1178
        %v1180 = vpop.f32.mrf.mxu0
        %v1181 = vadd.f32 0.0, %v1180
        %1182 = vmatprep.mubr.f32.mxu0 0.0
        %1183 = vmatmul.mubr.f32.gmra.mxu0 %v708
        %v1184 = vpop.f32.mrf.mxu0
        %v1185 = vadd.f32 0.0, %v1184
        %v1186 = vpop.f32.mrf.mxu0
        %v1187 = vadd.f32 0.0, %v1186
        %1188 = vmatprep.mubr.f32.mxu0 0.0
        %1189 = vmatmul.mubr.f32.gmra.mxu0 %v709
        %v1190 = vpop.f32.mrf.mxu0
        %v1191 = vadd.f32 0.0, %v1190
        %v1192 = vpop.f32.mrf.mxu0
        %v1193 = vadd.f32 0.0, %v1192
        %1194 = vmatprep.mubr.f32.mxu0 0.0
        %1195 = vmatmul.mubr.f32.gmra.mxu0 %v710
        %v1196 = vpop.f32.mrf.mxu0
        %v1197 = vadd.f32 0.0, %v1196
        %v1198 = vpop.f32.mrf.mxu0
        %v1199 = vadd.f32 0.0, %v1198
        %1200 = vmatprep.mubr.f32.mxu0 0.0
        %1201 = vmatmul.mubr.f32.gmra.mxu0 %v711
        %v1202 = vpop.f32.mrf.mxu0
        %v1203 = vadd.f32 0.0, %v1202
        %v1204 = vpop.f32.mrf.mxu0
        %v1205 = vadd.f32 0.0, %v1204
        %1206 = vmatprep.mubr.f32.mxu0 0.0
        %1207 = vmatmul.mubr.f32.gmra.mxu0 %v712
        %v1208 = vpop.f32.mrf.mxu0
        %v1209 = vadd.f32 0.0, %v1208
        %v1210 = vpop.f32.mrf.mxu0
        %v1211 = vadd.f32 0.0, %v1210
        %1212 = vmatprep.mubr.f32.mxu0 0.0
        %1213 = vmatmul.mubr.f32.gmra.mxu0 %v713
        %v1214 = vpop.f32.mrf.mxu0
        %v1215 = vadd.f32 0.0, %v1214
        %v1216 = vpop.f32.mrf.mxu0
        %v1217 = vadd.f32 0.0, %v1216
        %1218 = vmatprep.mubr.f32.mxu0 0.0
        %1219 = vmatmul.mubr.f32.gmra.mxu0 %v714
        %v1220 = vpop.f32.mrf.mxu0
        %v1221 = vadd.f32 0.0, %v1220
        %v1222 = vpop.f32.mrf.mxu0
        %v1223 = vadd.f32 0.0, %v1222
        %1224 = vmatprep.mubr.f32.mxu0 0.0
        %1225 = vmatmul.mubr.f32.gmra.mxu0 %v715
        %v1226 = vpop.f32.mrf.mxu0
        %v1227 = vadd.f32 0.0, %v1226
        %v1228 = vpop.f32.mrf.mxu0
        %v1229 = vadd.f32 0.0, %v1228
        %1230 = vmatprep.mubr.f32.mxu0 0.0
        %1231 = vmatmul.mubr.f32.gmra.mxu0 %v716
        %v1232 = vpop.f32.mrf.mxu0
        %v1233 = vadd.f32 0.0, %v1232
        %v1234 = vpop.f32.mrf.mxu0
        %v1235 = vadd.f32 0.0, %v1234
        %1236 = vmatprep.mubr.f32.mxu0 0.0
        %1237 = vmatmul.mubr.f32.gmra.mxu0 %v717
        %v1238 = vpop.f32.mrf.mxu0
        %v1239 = vadd.f32 0.0, %v1238
        %v1240 = vpop.f32.mrf.mxu0
        %v1241 = vadd.f32 0.0, %v1240
        %1242 = vmatprep.mubr.f32.mxu0 0.0
        %1243 = vmatmul.mubr.f32.gmra.mxu0 %v718
        %v1244 = vpop.f32.mrf.mxu0
        %v1245 = vadd.f32 0.0, %v1244
        %v1246 = vpop.f32.mrf.mxu0
        %v1247 = vadd.f32 0.0, %v1246
        %1248 = vmatprep.mubr.f32.mxu0 0.0
        %1249 = vmatmul.mubr.f32.gmra.mxu0 %v719
        %v1250 = vpop.f32.mrf.mxu0
        %v1251 = vadd.f32 0.0, %v1250
        %v1252 = vpop.f32.mrf.mxu0
        %v1253 = vadd.f32 0.0, %v1252
        %1254 = vmatprep.mubr.f32.mxu0 0.0
        %1255 = vmatmul.mubr.f32.gmra.mxu0 %v720
        %v1256 = vpop.f32.mrf.mxu0
        %v1257 = vadd.f32 0.0, %v1256
        %v1258 = vpop.f32.mrf.mxu0
        %v1259 = vadd.f32 0.0, %v1258
        %1260 = vmatprep.mubr.f32.mxu0 0.0
        %1261 = vmatmul.mubr.f32.gmra.mxu0 %v721
        %v1262 = vpop.f32.mrf.mxu0
        %v1263 = vadd.f32 0.0, %v1262
        %v1264 = vpop.f32.mrf.mxu0
        %v1265 = vadd.f32 0.0, %v1264
        %1266 = vmatprep.mubr.f32.mxu0 0.0
        %1267 = vmatmul.mubr.f32.gmra.mxu0 %v722
        %v1268 = vpop.f32.mrf.mxu0
        %v1269 = vadd.f32 0.0, %v1268
        %v1270 = vpop.f32.mrf.mxu0
        %v1271 = vadd.f32 0.0, %v1270
        %1272 = vmatprep.mubr.f32.mxu0 0.0
        %1273 = vmatmul.mubr.f32.gmra.mxu0 %v723
        %v1274 = vpop.f32.mrf.mxu0
        %v1275 = vadd.f32 0.0, %v1274
        %v1276 = vpop.f32.mrf.mxu0
        %v1277 = vadd.f32 0.0, %v1276
        %1278 = vmatprep.mubr.f32.mxu0 0.0
        %1279 = vmatmul.mubr.f32.gmra.mxu0 %v724
        %v1280 = vpop.f32.mrf.mxu0
        %v1281 = vadd.f32 0.0, %v1280
        %v1282 = vpop.f32.mrf.mxu0
        %v1283 = vadd.f32 0.0, %v1282
        %1284 = vmatprep.mubr.f32.mxu0 0.0
        %1285 = vmatmul.mubr.f32.gmra.mxu0 %v725
        %v1286 = vpop.f32.mrf.mxu0
        %v1287 = vadd.f32 0.0, %v1286
        %v1288 = vpop.f32.mrf.mxu0
        %v1289 = vadd.f32 0.0, %v1288
        %1290 = vmatprep.mubr.f32.mxu0 0.0
        %1291 = vmatmul.mubr.f32.gmra.mxu0 %v726
        %v1292 = vpop.f32.mrf.mxu0
        %v1293 = vadd.f32 0.0, %v1292
        %v1294 = vpop.f32.mrf.mxu0
        %v1295 = vadd.f32 0.0, %v1294
        %1296 = vmatprep.mubr.f32.mxu0 0.0
        %1297 = vmatmul.mubr.f32.gmra.mxu0 %v727
        %v1298 = vpop.f32.mrf.mxu0
        %v1299 = vadd.f32 0.0, %v1298
        %v1300 = vpop.f32.mrf.mxu0
        %v1301 = vadd.f32 0.0, %v1300
        %1302 = vmatprep.mubr.f32.mxu0 0.0
        %1303 = vmatmul.mubr.f32.gmra.mxu0 %v728
        %v1304 = vpop.f32.mrf.mxu0
        %v1305 = vadd.f32 0.0, %v1304
        %v1306 = vpop.f32.mrf.mxu0
        %v1307 = vadd.f32 0.0, %v1306
        %1308 = vmatprep.mubr.f32.mxu0 0.0
        %1309 = vmatmul.mubr.f32.gmra.mxu0 %v729
        %v1310 = vpop.f32.mrf.mxu0
        %v1311 = vadd.f32 0.0, %v1310
        %v1312 = vpop.f32.mrf.mxu0
        %v1313 = vadd.f32 0.0, %v1312
        %1314 = vmatprep.mubr.f32.mxu0 0.0
        %1315 = vmatmul.mubr.f32.gmra.mxu0 %v730
        %v1316 = vpop.f32.mrf.mxu0
        %v1317 = vadd.f32 0.0, %v1316
        %v1318 = vpop.f32.mrf.mxu0
        %v1319 = vadd.f32 0.0, %v1318
        %1320 = vmatprep.mubr.f32.mxu0 0.0
        %1321 = vmatmul.mubr.f32.gmra.mxu0 %v731
        %v1322 = vpop.f32.mrf.mxu0
        %v1323 = vadd.f32 0.0, %v1322
        %v1324 = vpop.f32.mrf.mxu0
        %v1325 = vadd.f32 0.0, %v1324
        %1326 = vmatprep.mubr.f32.mxu0 0.0
        %1327 = vmatmul.mubr.f32.gmra.mxu0 %v732
        %v1328 = vpop.f32.mrf.mxu0
        %v1329 = vadd.f32 0.0, %v1328
        %v1330 = vpop.f32.mrf.mxu0
        %v1331 = vadd.f32 0.0, %v1330
        %1332 = vmatprep.mubr.f32.mxu0 0.0
        %1333 = vmatmul.mubr.f32.gmra.mxu0 %v733
        %v1334 = vpop.f32.mrf.mxu0
        %v1335 = vadd.f32 0.0, %v1334
        %v1336 = vpop.f32.mrf.mxu0
        %v1337 = vadd.f32 0.0, %v1336
        %1338 = vmatprep.mubr.f32.mxu0 0.0
        %1339 = vmatmul.mubr.f32.gmra.mxu0 %v734
        %v1340 = vpop.f32.mrf.mxu0
        %v1341 = vadd.f32 0.0, %v1340
        %v1342 = vpop.f32.mrf.mxu0
        %v1343 = vadd.f32 0.0, %v1342
        %1344 = vdwg.mxu0
        %1345 = vst [vmem:[%s268] sm:$0xff] %v898
        %1346 = vst [vmem:[%s268 + $0x8] sm:$0xff] %v900
        %1347 = vst [vmem:[%s268 + $0x10] sm:$0xff] %v1155
        %1348 = vst [vmem:[%s268 + $0x18] sm:$0xff] %v1157
        %1349 = vst [vmem:[%s268 + $0x20] sm:$0xff] %v904
        %1350 = vst [vmem:[%s268 + $0x28] sm:$0xff] %v906
        %1351 = vst [vmem:[%s268 + $0x30] sm:$0xff] %v1161
        %1352 = vst [vmem:[%s268 + $0x38] sm:$0xff] %v1163
        %1353 = vst [vmem:[%s268 + $0x40] sm:$0xff] %v910
        %1354 = vst [vmem:[%s268 + $0x48] sm:$0xff] %v912
        %1355 = vst [vmem:[%s268 + $0x50] sm:$0xff] %v1167
        %1356 = vst [vmem:[%s268 + $0x58] sm:$0xff] %v1169
        %1357 = vst [vmem:[%s268 + $0x60] sm:$0xff] %v916
        %1358 = vst [vmem:[%s268 + $0x68] sm:$0xff] %v918
        %1359 = vst [vmem:[%s268 + $0x70] sm:$0xff] %v1173
        %1360 = vst [vmem:[%s268 + $0x78] sm:$0xff] %v1175
        %1361 = vst [vmem:[%s268 + $0x80] sm:$0xff] %v922
        %1362 = vst [vmem:[%s268 + $0x88] sm:$0xff] %v924
        %1363 = vst [vmem:[%s268 + $0x90] sm:$0xff] %v1179
        %1364 = vst [vmem:[%s268 + $0x98] sm:$0xff] %v1181
        %1365 = vst [vmem:[%s268 + $0xa0] sm:$0xff] %v928
        %1366 = vst [vmem:[%s268 + $0xa8] sm:$0xff] %v930
        %1367 = vst [vmem:[%s268 + $0xb0] sm:$0xff] %v1185
        %1368 = vst [vmem:[%s268 + $0xb8] sm:$0xff] %v1187
        %1369 = vst [vmem:[%s268 + $0xc0] sm:$0xff] %v934
        %1370 = vst [vmem:[%s268 + $0xc8] sm:$0xff] %v936
        %1371 = vst [vmem:[%s268 + $0xd0] sm:$0xff] %v1191
        %1372 = vst [vmem:[%s268 + $0xd8] sm:$0xff] %v1193
        %1373 = vst [vmem:[%s268 + $0xe0] sm:$0xff] %v940
        %1374 = vst [vmem:[%s268 + $0xe8] sm:$0xff] %v942
        %1375 = vst [vmem:[%s268 + $0xf0] sm:$0xff] %v1197
        %1376 = vst [vmem:[%s268 + $0xf8] sm:$0xff] %v1199
        %1377 = vst [vmem:[%s268 + $0x100] sm:$0xff] %v946
        %1378 = vst [vmem:[%s268 + $0x108] sm:$0xff] %v948
        %1379 = vst [vmem:[%s268 + $0x110] sm:$0xff] %v1203
        %1380 = vst [vmem:[%s268 + $0x118] sm:$0xff] %v1205
        %1381 = vst [vmem:[%s268 + $0x120] sm:$0xff] %v952
        %1382 = vst [vmem:[%s268 + $0x128] sm:$0xff] %v954
        %1383 = vst [vmem:[%s268 + $0x130] sm:$0xff] %v1209
        %1384 = vst [vmem:[%s268 + $0x138] sm:$0xff] %v1211
        %1385 = vst [vmem:[%s268 + $0x140] sm:$0xff] %v958
        %1386 = vst [vmem:[%s268 + $0x148] sm:$0xff] %v960
        %1387 = vst [vmem:[%s268 + $0x150] sm:$0xff] %v1215
        %1388 = vst [vmem:[%s268 + $0x158] sm:$0xff] %v1217
        %1389 = vst [vmem:[%s268 + $0x160] sm:$0xff] %v964
        %1390 = vst [vmem:[%s268 + $0x168] sm:$0xff] %v966
        %1391 = vst [vmem:[%s268 + $0x170] sm:$0xff] %v1221
        %1392 = vst [vmem:[%s268 + $0x178] sm:$0xff] %v1223
        %1393 = vst [vmem:[%s268 + $0x180] sm:$0xff] %v970
        %1394 = vst [vmem:[%s268 + $0x188] sm:$0xff] %v972
        %1395 = vst [vmem:[%s268 + $0x190] sm:$0xff] %v1227
        %1396 = vst [vmem:[%s268 + $0x198] sm:$0xff] %v1229
        %1397 = vst [vmem:[%s268 + $0x1a0] sm:$0xff] %v976
        %1398 = vst [vmem:[%s268 + $0x1a8] sm:$0xff] %v978
        %1399 = vst [vmem:[%s268 + $0x1b0] sm:$0xff] %v1233
        %1400 = vst [vmem:[%s268 + $0x1b8] sm:$0xff] %v1235
        %1401 = vst [vmem:[%s268 + $0x1c0] sm:$0xff] %v982
        %1402 = vst [vmem:[%s268 + $0x1c8] sm:$0xff] %v984
        %1403 = vst [vmem:[%s268 + $0x1d0] sm:$0xff] %v1239
        %1404 = vst [vmem:[%s268 + $0x1d8] sm:$0xff] %v1241
        %1405 = vst [vmem:[%s268 + $0x1e0] sm:$0xff] %v988
        %1406 = vst [vmem:[%s268 + $0x1e8] sm:$0xff] %v990
        %1407 = vst [vmem:[%s268 + $0x1f0] sm:$0xff] %v1245
        %1408 = vst [vmem:[%s268 + $0x1f8] sm:$0xff] %v1247
        %1409 = vst [vmem:[%s268 + $0x200] sm:$0xff] %v994
        %1410 = vst [vmem:[%s268 + $0x208] sm:$0xff] %v996
        %1411 = vst [vmem:[%s268 + $0x210] sm:$0xff] %v1251
        %1412 = vst [vmem:[%s268 + $0x218] sm:$0xff] %v1253
        %1413 = vst [vmem:[%s268 + $0x220] sm:$0xff] %v1000
        %1414 = vst [vmem:[%s268 + $0x228] sm:$0xff] %v1002
        %1415 = vst [vmem:[%s268 + $0x230] sm:$0xff] %v1257
        %1416 = vst [vmem:[%s268 + $0x238] sm:$0xff] %v1259
        %1417 = vst [vmem:[%s268 + $0x240] sm:$0xff] %v1006
        %1418 = vst [vmem:[%s268 + $0x248] sm:$0xff] %v1008
        %1419 = vst [vmem:[%s268 + $0x250] sm:$0xff] %v1263
        %1420 = vst [vmem:[%s268 + $0x258] sm:$0xff] %v1265
        %1421 = vst [vmem:[%s268 + $0x260] sm:$0xff] %v1012
        %1422 = vst [vmem:[%s268 + $0x268] sm:$0xff] %v1014
        %1423 = vst [vmem:[%s268 + $0x270] sm:$0xff] %v1269
        %1424 = vst [vmem:[%s268 + $0x278] sm:$0xff] %v1271
        %1425 = vst [vmem:[%s268 + $0x280] sm:$0xff] %v1018
        %1426 = vst [vmem:[%s268 + $0x288] sm:$0xff] %v1020
        %1427 = vst [vmem:[%s268 + $0x290] sm:$0xff] %v1275
        %1428 = vst [vmem:[%s268 + $0x298] sm:$0xff] %v1277
        %1429 = vst [vmem:[%s268 + $0x2a0] sm:$0xff] %v1024
        %1430 = vst [vmem:[%s268 + $0x2a8] sm:$0xff] %v1026
        %1431 = vst [vmem:[%s268 + $0x2b0] sm:$0xff] %v1281
        %1432 = vst [vmem:[%s268 + $0x2b8] sm:$0xff] %v1283
        %1433 = vst [vmem:[%s268 + $0x2c0] sm:$0xff] %v1030
        %1434 = vst [vmem:[%s268 + $0x2c8] sm:$0xff] %v1032
        %1435 = vst [vmem:[%s268 + $0x2d0] sm:$0xff] %v1287
        %1436 = vst [vmem:[%s268 + $0x2d8] sm:$0xff] %v1289
        %1437 = vst [vmem:[%s268 + $0x2e0] sm:$0xff] %v1036
        %1438 = vst [vmem:[%s268 + $0x2e8] sm:$0xff] %v1038
        %1439 = vst [vmem:[%s268 + $0x2f0] sm:$0xff] %v1293
        %1440 = vst [vmem:[%s268 + $0x2f8] sm:$0xff] %v1295
        %1441 = vst [vmem:[%s268 + $0x300] sm:$0xff] %v1042
        %1442 = vst [vmem:[%s268 + $0x308] sm:$0xff] %v1044
        %1443 = vst [vmem:[%s268 + $0x310] sm:$0xff] %v1299
        %1444 = vst [vmem:[%s268 + $0x318] sm:$0xff] %v1301
        %1445 = vst [vmem:[%s268 + $0x320] sm:$0xff] %v1048
        %1446 = vst [vmem:[%s268 + $0x328] sm:$0xff] %v1050
        %1447 = vst [vmem:[%s268 + $0x330] sm:$0xff] %v1305
        %1448 = vst [vmem:[%s268 + $0x338] sm:$0xff] %v1307
        %1449 = vst [vmem:[%s268 + $0x340] sm:$0xff] %v1054
        %1450 = vst [vmem:[%s268 + $0x348] sm:$0xff] %v1056
        %1451 = vst [vmem:[%s268 + $0x350] sm:$0xff] %v1311
        %1452 = vst [vmem:[%s268 + $0x358] sm:$0xff] %v1313
        %1453 = vst [vmem:[%s268 + $0x360] sm:$0xff] %v1060
        %1454 = vst [vmem:[%s268 + $0x368] sm:$0xff] %v1062
        %1455 = vst [vmem:[%s268 + $0x370] sm:$0xff] %v1317
        %1456 = vst [vmem:[%s268 + $0x378] sm:$0xff] %v1319
        %1457 = vst [vmem:[%s268 + $0x380] sm:$0xff] %v1066
        %1458 = vst [vmem:[%s268 + $0x388] sm:$0xff] %v1068
        %1459 = vst [vmem:[%s268 + $0x390] sm:$0xff] %v1323
        %1460 = vst [vmem:[%s268 + $0x398] sm:$0xff] %v1325
        %1461 = vst [vmem:[%s268 + $0x3a0] sm:$0xff] %v1072
        %1462 = vst [vmem:[%s268 + $0x3a8] sm:$0xff] %v1074
        %1463 = vst [vmem:[%s268 + $0x3b0] sm:$0xff] %v1329
        %1464 = vst [vmem:[%s268 + $0x3b8] sm:$0xff] %v1331
        %1465 = vst [vmem:[%s268 + $0x3c0] sm:$0xff] %v1078
        %1466 = vst [vmem:[%s268 + $0x3c8] sm:$0xff] %v1080
        %1467 = vst [vmem:[%s268 + $0x3d0] sm:$0xff] %v1335
        %1468 = vst [vmem:[%s268 + $0x3d8] sm:$0xff] %v1337
        %1469 = vst [vmem:[%s268 + $0x3e0] sm:$0xff] %v1084
        %1470 = vst [vmem:[%s268 + $0x3e8] sm:$0xff] %v1086
        %1471 = vst [vmem:[%s268 + $0x3f0] sm:$0xff] %v1341
        %1472 = vst [vmem:[%s268 + $0x3f8] sm:$0xff] %v1343
        %s1473 = sand.u32 %s124, 1
        %s1474 = scalar_lea.sflag [#allocation4], %s1473
        %s1475 = sand.u32 %s124, 1
        %s1476 = smul.addr %s1475, 256
        %s1477 = scalar_lea.vmem [#allocation7], %s1476
        %s1478 = sand.u32 %s150, 1
        %s1479 = scalar_lea.sflag [#allocation9], %s1478
        %s1480 = sand.u32 %s150, 1
        %s1481 = smul.addr %s1480, 1024
        %s1482 = scalar_lea.vmem [#allocation8], %s1481
        // Predicated region
        $region45: #{tpu_custom_call.1} parent=35 // pred_check
          %p1483 = pneg %p134
        $region46: #{tpu_custom_call.1} parent=35 // pred_check_branch
          %1485 = sbr.rel (%p1483) target = $region48
        $region47: #{tpu_custom_call.1} parent=35 // pred_region
          %s1486 = smul.u32 32, %s27
          %s1488 = ssub.s32 4096, 4096
          %1489 = vsyncadd %s1474, %s1488
          %s1490 = smul.addr %s1486, 128
          %s1491 = scalar_lea.hbm %s4, %s1490
          %s1492 = sshll.u32 %s1477, 4
          %s1493 = int_to_ptr.vmem [resolvable:$true] %s1492
          %1498 = dma.vmem_to_hbm [thread:$0]  %s1493, 4096, %s1491, %s1474, 128, 128, 8
        $region48: #{tpu_custom_call.1} parent=35 // pred_fallthru
          _
        // Predicated region
        $region49: #{tpu_custom_call.1} parent=35 // pred_check
          %p1499 = pneg %p160
        $region50: #{tpu_custom_call.1} parent=35 // pred_check_branch
          %1501 = sbr.rel (%p1499) target = $region52
        $region51: #{tpu_custom_call.1} parent=35 // pred_region
          %s1502 = smul.u32 32, %s27
          %s1504 = ssub.s32 16384, 16384
          %1505 = vsyncadd %s1479, %s1504
          %s1506 = smul.addr %s1502, 4
          %s1507 = smul.addr %s1506, 128
          %s1508 = scalar_lea.hbm %s5, %s1507
          %s1509 = sshll.u32 %s1482, 4
          %s1510 = int_to_ptr.vmem [resolvable:$true] %s1509
          %1515 = dma.vmem_to_hbm [thread:$0]  %s1510, 16384, %s1508, %s1479, 512, 512, 32
        $region52: #{tpu_custom_call.1} parent=35 // pred_fallthru
          _
      $region36: #{tpu_custom_call.1} parent=5 // pred_fallthru
        _
      %p1516 = scmp.le.s32.totalorder 2, %s22
      // Predicated region
      $region53: #{tpu_custom_call.1} parent=5 // pred_check
        %p1517 = pneg %p1516
      $region54: #{tpu_custom_call.1} parent=5 // pred_check_branch
        %1519 = sbr.rel (%p1517) target = $region56
      $region55: #{tpu_custom_call.1} parent=5 // pred_region
        %s1520 = ssub.s32 %s22, 2
        // Predicated region
        $region57: #{tpu_custom_call.1} parent=55 // pred_check
          %p1521 = pneg %p140
        $region58: #{tpu_custom_call.1} parent=55 // pred_check_branch
          %1523 = sbr.rel (%p1521) target = $region60
        $region59: #{tpu_custom_call.1} parent=55 // pred_region
          %s1524 = sand.u32 %s125, 1
          %s1525 = scalar_lea.sflag [#allocation4], %s1524
          %s1526 = sand.u32 %s125, 1
          %s1527 = smul.addr %s1526, 256
          %s1528 = scalar_lea.vmem [#allocation7], %s1527
          %1529 = dma.done %s1525, 4096
        $region60: #{tpu_custom_call.1} parent=55 // pred_fallthru
          _
        // Predicated region
        $region61: #{tpu_custom_call.1} parent=55 // pred_check
          %p1530 = pneg %p166
        $region62: #{tpu_custom_call.1} parent=55 // pred_check_branch
          %1532 = sbr.rel (%p1530) target = $region64
        $region63: #{tpu_custom_call.1} parent=55 // pred_region
          %s1533 = sand.u32 %s151, 1
          %s1534 = scalar_lea.sflag [#allocation9], %s1533
          %s1535 = sand.u32 %s151, 1
          %s1536 = smul.addr %s1535, 1024
          %s1537 = scalar_lea.vmem [#allocation8], %s1536
          %1538 = dma.done %s1534, 16384
        $region64: #{tpu_custom_call.1} parent=55 // pred_fallthru
          _
      $region56: #{tpu_custom_call.1} parent=5 // pred_fallthru
        _
    $region6: #{tpu_custom_call.1} parent=1 // loop_footer
      %s26 = sadd.s32 1, %s22
    $region7: #{tpu_custom_call.1} parent=1 // loop_footer_branch
      %21 = sbr.rel target = $region3
    $region8: #{tpu_custom_call.1} parent=1 // loop_exit
      _
    %1539 = vsyncpa [#allocation3], 1
    %s1540 = scalar_lea.sflag [#allocation3], 1
    %1541 = vsyncpa %s1540, 1
    %1542 = vsyncpa [#allocation6], 1
    %1543 = vsyncpa [#allocation4], 1
    %s1544 = scalar_lea.sflag [#allocation4], 1
    %1545 = vsyncpa %s1544, 1
    %1546 = vsyncpa [#allocation9], 1
    %s1547 = scalar_lea.sflag [#allocation9], 1
    %1548 = vsyncpa %s1547, 1

</llo_original>
